<compile_context>
chip_gen: v7x
topology: tpu7x:2x2x1
jax: 0.10.0
libtpu: 0.0.40
codegen_flags: <defaults>
</compile_context>

<pallas_src>
import jax
import jax.numpy as jnp
from jax.experimental import pallas as pl
from jax.experimental.pallas import tpu as pltpu

BN_EPS = 1e-3                 # YOLO Conv uses BatchNorm2d(out_ch, eps=0.001)
PADL = 128                    # lane-aligned halo on each side of the stacked scratch
COMPUTE_DTYPE = jnp.float32   # jnp.bfloat16 for production shapes (relax tolerance)


def _round_up(v, m):
    return (v + m - 1) // m * m


# -------------------------------------------------------------- param setup --

def make_conv_params(key, cin, cout, k):
    """Deterministic weights for Conv = Conv2d(bias=False) + BN + SiLU."""
    kw, kg, kb, km, kv = jax.random.split(key, 5)
    w = 0.1 * jax.random.normal(kw, (cout, cin, k, k), jnp.float32)   # OIHW
    gamma = 1.0 + 0.1 * jax.random.normal(kg, (cout,), jnp.float32)
    beta = 0.1 * jax.random.normal(kb, (cout,), jnp.float32)
    mean = 0.1 * jax.random.normal(km, (cout,), jnp.float32)
    var = 1.0 + 0.1 * jnp.abs(jax.random.normal(kv, (cout,), jnp.float32))
    return dict(w=w, gamma=gamma, beta=beta, mean=mean, var=var, k=k)


def _bn_fold(p):
    scale = p["gamma"] / jnp.sqrt(p["var"] + BN_EPS)
    bias = p["beta"] - scale * p["mean"]
    return scale, bias


def pack_csp_params(params, half_pad, cdt):
    """Fold BN scale into conv weights and repack for the fused kernel."""

    def fold_1x1(p):
        scale, bias = _bn_fold(p)
        return p["w"][:, :, 0, 0] * scale[:, None], bias[:, None]

    def fold_3x3(p):
        # -> (co, 9*half_pad); contraction index = tap*half_pad + ci, tap = di*3+dj
        scale, bias = _bn_fold(p)
        w = p["w"] * scale[:, None, None, None]                 # (co, ci, 3, 3)
        co, ci = w.shape[:2]
        w_t = jnp.transpose(w, (0, 2, 3, 1)).reshape(co, 9, ci)  # [o, tap, ci]
        w_p = jnp.zeros((co, 9, half_pad), jnp.float32).at[:, :, :ci].set(w_t)
        return w_p.reshape(co, 9 * half_pad), bias[:, None]

    wl, bl = fold_1x1(params["conv_left"])
    wr, br = fold_1x1(params["conv_right"])
    w_lr = jnp.concatenate([wl, wr], axis=0)                    # (2*half, cin)
    b_lr = jnp.concatenate([bl, br], axis=0)                    # (2*half, 1)

    res_w, res_b = [], []
    for p1, p2 in params["residuals"]:
        for p in (p1, p2):
            w9, b = fold_3x3(p)
            res_w.append(w9)
            res_b.append(b)
    res_w = jnp.stack(res_w, axis=0)                            # (2R, half, 9*half_pad)
    res_b = jnp.stack(res_b, axis=0)                            # (2R, half, 1)

    wb, b_bot = fold_1x1(params["conv_bottom"])                 # (cout, (2+R)*half)
    half = params["conv_left"]["w"].shape[0]
    num_feats = wb.shape[1] // half
    w_bot = jnp.stack([wb[:, f * half:(f + 1) * half] for f in range(num_feats)],
                      axis=0)                                   # (2+R, cout, half)

    return dict(w_lr=w_lr.astype(cdt), b_lr=b_lr,
                res_w=res_w.astype(cdt), res_b=res_b,
                w_bot=w_bot.astype(cdt), b_bot=b_bot)


def make_masks(H, W, cdt):
    """Column-wrap masks (dj==0 / dj==2 taps); row wrap is handled by the halo."""
    ww = jnp.arange(H * W, dtype=jnp.int32) % W
    m0 = (ww <= W - 2).astype(cdt)    # sources consumed by dj==0 taps (drop last col)
    m2 = (ww >= 1).astype(cdt)        # sources consumed by dj==2 taps (drop first col)
    return jnp.stack([m0, m2], axis=0)                          # (2, H*W)


# ------------------------------------------------------------------- kernel --

def _make_csp_kernel(half, half_pad, cout, H, W, num_res, use_add, cdt):
    M = H * W

    def kernel(x_ref, masks_ref, w_lr_ref, b_lr_ref, res_w_ref, res_b_ref,
               w_bot_ref, b_bot_ref, o_ref, stk_ref):
        # Re-zero the stacked-window scratch each step: the never-written halo
        # fringe + sublane padding must read as 0, and per-step init stays
        # correct even when the "parallel" batch axis is split across cores.
        stk_ref[...] = jnp.zeros(stk_ref.shape, stk_ref.dtype)

        x = x_ref[0].astype(cdt)                 # (cin, M), channel-major
        mask_l = masks_ref[0:1]                  # (1, M)   dj==0 taps
        mask_r = masks_ref[1:2]                  # (1, M)   dj==2 taps

        def silu(v):
            return v * jax.nn.sigmoid(v)

        # conv_left + conv_right fused as a single 1x1-conv matmul.
        y = jnp.dot(w_lr_ref[...], x, preferred_element_type=jnp.float32)
        y = silu(y + b_lr_ref[...])
        left = y[:half]                          # (half, M) f32
        cur = y[half:]                           # (half, M) f32

        # conv_bottom accumulated incrementally; init with the first dot.
        acc = jnp.dot(w_bot_ref[0], left.astype(cdt),
                      preferred_element_type=jnp.float32)
        acc = acc + jnp.dot(w_bot_ref[1], cur.astype(cdt),
                            preferred_element_type=jnp.float32)

        def conv3x3(feat, layer):
            # Write the 9 shifted (column-masked) windows into the tap-stacked,
            # lane-haloed scratch, then ONE matmul with K = 9*half_pad.
            f = feat.astype(cdt)
            variants = (f * mask_l, f, f * mask_r)      # indexed by dj
            for di in range(3):
                for dj in range(3):
                    t = di * 3 + dj
                    off = (di - 1) * W + (dj - 1)
                    stk_ref[t * half_pad:t * half_pad + half,
                            PADL - off:PADL - off + M] = variants[dj]
            win = stk_ref[:, PADL:PADL + M]              # lane-aligned read
            out = jnp.dot(res_w_ref[layer], win,
                          preferred_element_type=jnp.float32)
            return silu(out + res_b_ref[layer])

        for r in range(num_res):
            h = conv3x3(conv3x3(cur, 2 * r), 2 * r + 1)
            cur = h + cur if use_add else h
            acc = acc + jnp.dot(w_bot_ref[2 + r], cur.astype(cdt),
                                preferred_element_type=jnp.float32)

        o_ref[0] = silu(acc + b_bot_ref[...]).astype(o_ref.dtype)

    return kernel


# ----------------------------------------------------------- forward (Pallas) --

def csp_forward_pallas(x_nchw, params, use_residual_add=True):
    N, cin, H, W = x_nchw.shape
    M = H * W
    half = params["conv_left"]["w"].shape[0]
    cout = params["conv_bottom"]["w"].shape[0]
    num_res = len(params["residuals"])
    assert num_res >= 1
    num_feats = 2 + num_res
    half_pad = max(8, _round_up(half, 8))
    assert PADL >= W + 1, "halo must cover a one-row spatial shift"

    cdt = COMPUTE_DTYPE
    packed = pack_csp_params(params, half_pad, cdt)
    masks = make_masks(H, W, cdt)
    kernel = _make_csp_kernel(half, half_pad, cout, H, W, num_res,
                              use_residual_add, cdt)

    x3 = x_nchw.reshape(N, cin, M)          # NCHW kept: channel-major (C, H*W)

    out = pl.pallas_call(
        kernel,
        out_shape=jax.ShapeDtypeStruct((N, cout, M), jnp.float32),
        grid_spec=pltpu.PrefetchScalarGridSpec(
            num_scalar_prefetch=0,
            grid=(N,),
            in_specs=[
                pl.BlockSpec((1, cin, M), lambda b: (b, 0, 0)),
                pl.BlockSpec((2, M), lambda b: (0, 0)),
                pl.BlockSpec((2 * half, cin), lambda b: (0, 0)),
                pl.BlockSpec((2 * half, 1), lambda b: (0, 0)),
                pl.BlockSpec((2 * num_res, half, 9 * half_pad),
                             lambda b: (0, 0, 0)),
                pl.BlockSpec((2 * num_res, half, 1), lambda b: (0, 0, 0)),
                pl.BlockSpec((num_feats, cout, half), lambda b: (0, 0, 0)),
                pl.BlockSpec((cout, 1), lambda b: (0, 0)),
            ],
            out_specs=pl.BlockSpec((1, cout, M), lambda b: (b, 0, 0)),
            scratch_shapes=[
                pltpu.VMEM((9 * half_pad, PADL + M + PADL), cdt),
            ],
        ),
        compiler_params=pltpu.CompilerParams(
            dimension_semantics=("parallel",)),
    )(x3, masks, packed["w_lr"], packed["b_lr"], packed["res_w"],
      packed["res_b"], packed["w_bot"], packed["b_bot"])
    return out.reshape(N, cout, H, W)


# --------------------------------------------------------- reference (jnp) --

def _ref_conv(x_nchw, p):
    k = p["k"]
    y = jax.lax.conv_general_dilated(
        x_nchw, p["w"], window_strides=(1, 1),
        padding=[(k // 2, k // 2)] * 2,
        dimension_numbers=("NCHW", "OIHW", "NCHW"))
    scale, bias = _bn_fold(p)
    y = y * scale[None, :, None, None] + bias[None, :, None, None]
    return y * jax.nn.sigmoid(y)


def csp_forward_ref(x_nchw, params, use_residual_add=True):
    left = _ref_conv(x_nchw, params["conv_left"])
    right = _ref_conv(x_nchw, params["conv_right"])
    features = [left, right]
    cur = right
    for p1, p2 in params["residuals"]:
        h = _ref_conv(_ref_conv(cur, p1), p2)
        cur = h + cur if use_residual_add else h
        features.append(cur)
    return _ref_conv(jnp.concatenate(features, axis=1), params["conv_bottom"])


# -------------------------------------------------------------------- main --

if __name__ == "__main__":
    in_channels, out_channels, num_residuals = 4, 8, 2
    use_residual_add = True
    half = out_channels // 2

    root = jax.random.PRNGKey(0)
    kx, kl, kr, kb, *kres = jax.random.split(root, 4 + 2 * num_residuals)

    x = jax.random.normal(kx, (2, in_channels, 16, 16), jnp.float32)   # NCHW

    params = {
        "conv_left": make_conv_params(kl, in_channels, half, 1),
        "conv_right": make_conv_params(kr, in_channels, half, 1),
        "conv_bottom": make_conv_params(kb, (2 + num_residuals) * half,
                                        out_channels, 1),
        "residuals": [
            (make_conv_params(kres[2 * i], half, half, 3),
             make_conv_params(kres[2 * i + 1], half, half, 3))
            for i in range(num_residuals)
        ],
    }

    out = csp_forward_pallas(x, params, use_residual_add)
    out = jax.block_until_ready(out)

    ref = csp_forward_ref(x, params, use_residual_add)
    assert out.shape == (2, out_channels, 16, 16), out.shape
    err = float(jnp.abs(out - ref).max())
    assert jnp.allclose(out, ref, atol=1e-4, rtol=1e-4), err

    print("KERNEL_OK")
</pallas_src>

<mosaic_0001>
module attributes {stable_mosaic.version = 11 : i64} {
  func.func @kernel(%arg0: i32, %arg1: memref<1x4x256xf32, #tpu.memory_space<vmem>>, %arg2: memref<2x256xf32, #tpu.memory_space<vmem>>, %arg3: memref<8x4xf32, #tpu.memory_space<vmem>>, %arg4: memref<8x1xf32, #tpu.memory_space<vmem>>, %arg5: memref<4x4x72xf32, #tpu.memory_space<vmem>>, %arg6: memref<4x4x1xf32, #tpu.memory_space<vmem>>, %arg7: memref<4x8x4xf32, #tpu.memory_space<vmem>>, %arg8: memref<8x1xf32, #tpu.memory_space<vmem>>, %arg9: memref<1x8x256xf32, #tpu.memory_space<vmem>>, %arg10: memref<72x512xf32, #tpu.memory_space<vmem>>) attributes {dimension_semantics = [#tpu.dimension_semantics<parallel>], iteration_bounds = array<i64: 2>, scalar_prefetch = 0 : i64, scratch_operands = 1 : i64, tpu.core_type = #tpu.core_type<tc>, window_params = [{transform_indices = @transform_0, window_bounds = array<i64: 1, 4, 256>}, {pipeline_mode = #tpu.pipeline_mode<synchronous>, transform_indices = @transform_1, window_bounds = array<i64: 2, 256>}, {pipeline_mode = #tpu.pipeline_mode<synchronous>, transform_indices = @transform_2, window_bounds = array<i64: 8, 4>}, {pipeline_mode = #tpu.pipeline_mode<synchronous>, transform_indices = @transform_3, window_bounds = array<i64: 8, 1>}, {pipeline_mode = #tpu.pipeline_mode<synchronous>, transform_indices = @transform_4, window_bounds = array<i64: 4, 4, 72>}, {pipeline_mode = #tpu.pipeline_mode<synchronous>, transform_indices = @transform_5, window_bounds = array<i64: 4, 4, 1>}, {pipeline_mode = #tpu.pipeline_mode<synchronous>, transform_indices = @transform_6, window_bounds = array<i64: 4, 8, 4>}, {pipeline_mode = #tpu.pipeline_mode<synchronous>, transform_indices = @transform_7, window_bounds = array<i64: 8, 1>}, {transform_indices = @transform_8, window_bounds = array<i64: 1, 8, 256>}]} {
    %cst = arith.constant 0.000000e+00 : f32
    %0 = vector.broadcast %cst : f32 to vector<72x512xf32>
    %c0 = arith.constant 0 : index
    %c0_0 = arith.constant 0 : index
    %1 = vector.load %arg10[%c0, %c0_0] : memref<72x512xf32, #tpu.memory_space<vmem>>, vector<72x512xf32>
    tpu.vector_store %arg10[%c0, %c0_0], %0 {strides = array<i32>} : memref<72x512xf32, #tpu.memory_space<vmem>>, vector<72x512xf32>,
    %c0_1 = arith.constant 0 : index
    %c0_2 = arith.constant 0 : index
    %c0_3 = arith.constant 0 : index
    %2 = vector.load %arg1[%c0_1, %c0_2, %c0_3] : memref<1x4x256xf32, #tpu.memory_space<vmem>>, vector<1x4x256xf32>
    %3 = vector.shape_cast %2 : vector<1x4x256xf32> to vector<4x256xf32>
    %c0_4 = arith.constant 0 : index
    %c0_5 = arith.constant 0 : index
    %4 = vector.load %arg2[%c0_4, %c0_5] : memref<2x256xf32, #tpu.memory_space<vmem>>, vector<1x256xf32>
    %c1 = arith.constant 1 : index
    %c0_6 = arith.constant 0 : index
    %5 = vector.load %arg2[%c1, %c0_6] : memref<2x256xf32, #tpu.memory_space<vmem>>, vector<1x256xf32>
    %c0_7 = arith.constant 0 : index
    %c0_8 = arith.constant 0 : index
    %6 = vector.load %arg3[%c0_7, %c0_8] : memref<8x4xf32, #tpu.memory_space<vmem>>, vector<8x4xf32>
    %cst_9 = arith.constant dense<0.000000e+00> : vector<8x256xf32>
    %7 = tpu.matmul %6, %3, %cst_9 {dimension_numbers = #tpu.dot_dimension_numbers<[1], [0], [0], [1], [0, 0, 1, 1], [], []>} : vector<8x4xf32>, vector<4x256xf32>, vector<8x256xf32> -> vector<8x256xf32>
    %c0_10 = arith.constant 0 : index
    %c0_11 = arith.constant 0 : index
    %8 = vector.load %arg4[%c0_10, %c0_11] : memref<8x1xf32, #tpu.memory_space<vmem>>, vector<8x1xf32>
    %9 = vector.broadcast %8 : vector<8x1xf32> to vector<8x256xf32>
    %10 = arith.addf %7, %9 : vector<8x256xf32>
    %11 = arith.negf %10 : vector<8x256xf32>
    %12 = math.exp %11 : vector<8x256xf32>
    %cst_12 = arith.constant 1.000000e+00 : f32
    %13 = vector.broadcast %cst_12 : f32 to vector<8x256xf32>
    %14 = arith.addf %13, %12 : vector<8x256xf32>
    %15 = arith.divf %13, %14 : vector<8x256xf32>
    %16 = arith.mulf %10, %15 : vector<8x256xf32>
    %17 = vector.extract_strided_slice %16 {offsets = [0, 0], sizes = [4, 256], strides = [1, 1]} : vector<8x256xf32> to vector<4x256xf32>
    %18 = vector.extract_strided_slice %16 {offsets = [4, 0], sizes = [4, 256], strides = [1, 1]} : vector<8x256xf32> to vector<4x256xf32>
    %c0_13 = arith.constant 0 : index
    %c0_14 = arith.constant 0 : index
    %c0_15 = arith.constant 0 : index
    %19 = vector.load %arg7[%c0_13, %c0_14, %c0_15] : memref<4x8x4xf32, #tpu.memory_space<vmem>>, vector<1x8x4xf32>
    %20 = vector.shape_cast %19 : vector<1x8x4xf32> to vector<8x4xf32>
    %cst_16 = arith.constant dense<0.000000e+00> : vector<8x256xf32>
    %21 = tpu.matmul %20, %17, %cst_16 {dimension_numbers = #tpu.dot_dimension_numbers<[1], [0], [0], [1], [0, 0, 1, 1], [], []>} : vector<8x4xf32>, vector<4x256xf32>, vector<8x256xf32> -> vector<8x256xf32>
    %c1_17 = arith.constant 1 : index
    %c0_18 = arith.constant 0 : index
    %c0_19 = arith.constant 0 : index
    %22 = vector.load %arg7[%c1_17, %c0_18, %c0_19] : memref<4x8x4xf32, #tpu.memory_space<vmem>>, vector<1x8x4xf32>
    %23 = vector.shape_cast %22 : vector<1x8x4xf32> to vector<8x4xf32>
    %cst_20 = arith.constant dense<0.000000e+00> : vector<8x256xf32>
    %24 = tpu.matmul %23, %18, %cst_20 {dimension_numbers = #tpu.dot_dimension_numbers<[1], [0], [0], [1], [0, 0, 1, 1], [], []>} : vector<8x4xf32>, vector<4x256xf32>, vector<8x256xf32> -> vector<8x256xf32>
    %25 = arith.addf %21, %24 : vector<8x256xf32>
    %26 = vector.broadcast %4 : vector<1x256xf32> to vector<4x256xf32>
    %27 = arith.mulf %18, %26 : vector<4x256xf32>
    %28 = vector.broadcast %5 : vector<1x256xf32> to vector<4x256xf32>
    %29 = arith.mulf %18, %28 : vector<4x256xf32>
    %c0_21 = arith.constant 0 : index
    %c145 = arith.constant 145 : index
    %30 = vector.load %arg10[%c0_21, %c145] : memref<72x512xf32, #tpu.memory_space<vmem>>, vector<4x256xf32>
    tpu.vector_store %arg10[%c0_21, %c145], %27 {strides = array<i32>} : memref<72x512xf32, #tpu.memory_space<vmem>>, vector<4x256xf32>,
    %c8 = arith.constant 8 : index
    %c144 = arith.constant 144 : index
    %31 = vector.load %arg10[%c8, %c144] : memref<72x512xf32, #tpu.memory_space<vmem>>, vector<4x256xf32>
    tpu.vector_store %arg10[%c8, %c144], %18 {strides = array<i32>} : memref<72x512xf32, #tpu.memory_space<vmem>>, vector<4x256xf32>,
    %c16 = arith.constant 16 : index
    %c143 = arith.constant 143 : index
    %32 = vector.load %arg10[%c16, %c143] : memref<72x512xf32, #tpu.memory_space<vmem>>, vector<4x256xf32>
    tpu.vector_store %arg10[%c16, %c143], %29 {strides = array<i32>} : memref<72x512xf32, #tpu.memory_space<vmem>>, vector<4x256xf32>,
    %c24 = arith.constant 24 : index
    %c129 = arith.constant 129 : index
    %33 = vector.load %arg10[%c24, %c129] : memref<72x512xf32, #tpu.memory_space<vmem>>, vector<4x256xf32>
    tpu.vector_store %arg10[%c24, %c129], %27 {strides = array<i32>} : memref<72x512xf32, #tpu.memory_space<vmem>>, vector<4x256xf32>,
    %c32 = arith.constant 32 : index
    %c128 = arith.constant 128 : index
    %34 = vector.load %arg10[%c32, %c128] : memref<72x512xf32, #tpu.memory_space<vmem>>, vector<4x256xf32>
    tpu.vector_store %arg10[%c32, %c128], %18 {strides = array<i32>} : memref<72x512xf32, #tpu.memory_space<vmem>>, vector<4x256xf32>,
    %c40 = arith.constant 40 : index
    %c127 = arith.constant 127 : index
    %35 = vector.load %arg10[%c40, %c127] : memref<72x512xf32, #tpu.memory_space<vmem>>, vector<4x256xf32>
    tpu.vector_store %arg10[%c40, %c127], %29 {strides = array<i32>} : memref<72x512xf32, #tpu.memory_space<vmem>>, vector<4x256xf32>,
    %c48 = arith.constant 48 : index
    %c113 = arith.constant 113 : index
    %36 = vector.load %arg10[%c48, %c113] : memref<72x512xf32, #tpu.memory_space<vmem>>, vector<4x256xf32>
    tpu.vector_store %arg10[%c48, %c113], %27 {strides = array<i32>} : memref<72x512xf32, #tpu.memory_space<vmem>>, vector<4x256xf32>,
    %c56 = arith.constant 56 : index
    %c112 = arith.constant 112 : index
    %37 = vector.load %arg10[%c56, %c112] : memref<72x512xf32, #tpu.memory_space<vmem>>, vector<4x256xf32>
    tpu.vector_store %arg10[%c56, %c112], %18 {strides = array<i32>} : memref<72x512xf32, #tpu.memory_space<vmem>>, vector<4x256xf32>,
    %c64 = arith.constant 64 : index
    %c111 = arith.constant 111 : index
    %38 = vector.load %arg10[%c64, %c111] : memref<72x512xf32, #tpu.memory_space<vmem>>, vector<4x256xf32>
    tpu.vector_store %arg10[%c64, %c111], %29 {strides = array<i32>} : memref<72x512xf32, #tpu.memory_space<vmem>>, vector<4x256xf32>,
    %c0_22 = arith.constant 0 : index
    %c128_23 = arith.constant 128 : index
    %39 = vector.load %arg10[%c0_22, %c128_23] : memref<72x512xf32, #tpu.memory_space<vmem>>, vector<72x256xf32>
    %c0_24 = arith.constant 0 : index
    %c0_25 = arith.constant 0 : index
    %c0_26 = arith.constant 0 : index
    %40 = vector.load %arg5[%c0_24, %c0_25, %c0_26] : memref<4x4x72xf32, #tpu.memory_space<vmem>>, vector<1x4x72xf32>
    %41 = vector.shape_cast %40 : vector<1x4x72xf32> to vector<4x72xf32>
    %cst_27 = arith.constant dense<0.000000e+00> : vector<4x256xf32>
    %42 = tpu.matmul %41, %39, %cst_27 {dimension_numbers = #tpu.dot_dimension_numbers<[1], [0], [0], [1], [0, 0, 1, 1], [], []>} : vector<4x72xf32>, vector<72x256xf32>, vector<4x256xf32> -> vector<4x256xf32>
    %c0_28 = arith.constant 0 : index
    %c0_29 = arith.constant 0 : index
    %c0_30 = arith.constant 0 : index
    %43 = vector.load %arg6[%c0_28, %c0_29, %c0_30] : memref<4x4x1xf32, #tpu.memory_space<vmem>>, vector<1x4x1xf32>
    %44 = vector.shape_cast %43 : vector<1x4x1xf32> to vector<4x1xf32>
    %45 = vector.broadcast %44 : vector<4x1xf32> to vector<4x256xf32>
    %46 = arith.addf %42, %45 : vector<4x256xf32>
    %47 = arith.negf %46 : vector<4x256xf32>
    %48 = math.exp %47 : vector<4x256xf32>
    %cst_31 = arith.constant 1.000000e+00 : f32
    %49 = vector.broadcast %cst_31 : f32 to vector<4x256xf32>
    %50 = arith.addf %49, %48 : vector<4x256xf32>
    %51 = arith.divf %49, %50 : vector<4x256xf32>
    %52 = arith.mulf %46, %51 : vector<4x256xf32>
    %53 = vector.broadcast %4 : vector<1x256xf32> to vector<4x256xf32>
    %54 = arith.mulf %52, %53 : vector<4x256xf32>
    %55 = vector.broadcast %5 : vector<1x256xf32> to vector<4x256xf32>
    %56 = arith.mulf %52, %55 : vector<4x256xf32>
    %c0_32 = arith.constant 0 : index
    %c145_33 = arith.constant 145 : index
    %57 = vector.load %arg10[%c0_32, %c145_33] : memref<72x512xf32, #tpu.memory_space<vmem>>, vector<4x256xf32>
    tpu.vector_store %arg10[%c0_32, %c145_33], %54 {strides = array<i32>} : memref<72x512xf32, #tpu.memory_space<vmem>>, vector<4x256xf32>,
    %c8_34 = arith.constant 8 : index
    %c144_35 = arith.constant 144 : index
    %58 = vector.load %arg10[%c8_34, %c144_35] : memref<72x512xf32, #tpu.memory_space<vmem>>, vector<4x256xf32>
    tpu.vector_store %arg10[%c8_34, %c144_35], %52 {strides = array<i32>} : memref<72x512xf32, #tpu.memory_space<vmem>>, vector<4x256xf32>,
    %c16_36 = arith.constant 16 : index
    %c143_37 = arith.constant 143 : index
    %59 = vector.load %arg10[%c16_36, %c143_37] : memref<72x512xf32, #tpu.memory_space<vmem>>, vector<4x256xf32>
    tpu.vector_store %arg10[%c16_36, %c143_37], %56 {strides = array<i32>} : memref<72x512xf32, #tpu.memory_space<vmem>>, vector<4x256xf32>,
    %c24_38 = arith.constant 24 : index
    %c129_39 = arith.constant 129 : index
    %60 = vector.load %arg10[%c24_38, %c129_39] : memref<72x512xf32, #tpu.memory_space<vmem>>, vector<4x256xf32>
    tpu.vector_store %arg10[%c24_38, %c129_39], %54 {strides = array<i32>} : memref<72x512xf32, #tpu.memory_space<vmem>>, vector<4x256xf32>,
    %c32_40 = arith.constant 32 : index
    %c128_41 = arith.constant 128 : index
    %61 = vector.load %arg10[%c32_40, %c128_41] : memref<72x512xf32, #tpu.memory_space<vmem>>, vector<4x256xf32>
    tpu.vector_store %arg10[%c32_40, %c128_41], %52 {strides = array<i32>} : memref<72x512xf32, #tpu.memory_space<vmem>>, vector<4x256xf32>,
    %c40_42 = arith.constant 40 : index
    %c127_43 = arith.constant 127 : index
    %62 = vector.load %arg10[%c40_42, %c127_43] : memref<72x512xf32, #tpu.memory_space<vmem>>, vector<4x256xf32>
    tpu.vector_store %arg10[%c40_42, %c127_43], %56 {strides = array<i32>} : memref<72x512xf32, #tpu.memory_space<vmem>>, vector<4x256xf32>,
    %c48_44 = arith.constant 48 : index
    %c113_45 = arith.constant 113 : index
    %63 = vector.load %arg10[%c48_44, %c113_45] : memref<72x512xf32, #tpu.memory_space<vmem>>, vector<4x256xf32>
    tpu.vector_store %arg10[%c48_44, %c113_45], %54 {strides = array<i32>} : memref<72x512xf32, #tpu.memory_space<vmem>>, vector<4x256xf32>,
    %c56_46 = arith.constant 56 : index
    %c112_47 = arith.constant 112 : index
    %64 = vector.load %arg10[%c56_46, %c112_47] : memref<72x512xf32, #tpu.memory_space<vmem>>, vector<4x256xf32>
    tpu.vector_store %arg10[%c56_46, %c112_47], %52 {strides = array<i32>} : memref<72x512xf32, #tpu.memory_space<vmem>>, vector<4x256xf32>,
    %c64_48 = arith.constant 64 : index
    %c111_49 = arith.constant 111 : index
    %65 = vector.load %arg10[%c64_48, %c111_49] : memref<72x512xf32, #tpu.memory_space<vmem>>, vector<4x256xf32>
    tpu.vector_store %arg10[%c64_48, %c111_49], %56 {strides = array<i32>} : memref<72x512xf32, #tpu.memory_space<vmem>>, vector<4x256xf32>,
    %c0_50 = arith.constant 0 : index
    %c128_51 = arith.constant 128 : index
    %66 = vector.load %arg10[%c0_50, %c128_51] : memref<72x512xf32, #tpu.memory_space<vmem>>, vector<72x256xf32>
    %c1_52 = arith.constant 1 : index
    %c0_53 = arith.constant 0 : index
    %c0_54 = arith.constant 0 : index
    %67 = vector.load %arg5[%c1_52, %c0_53, %c0_54] : memref<4x4x72xf32, #tpu.memory_space<vmem>>, vector<1x4x72xf32>
    %68 = vector.shape_cast %67 : vector<1x4x72xf32> to vector<4x72xf32>
    %cst_55 = arith.constant dense<0.000000e+00> : vector<4x256xf32>
    %69 = tpu.matmul %68, %66, %cst_55 {dimension_numbers = #tpu.dot_dimension_numbers<[1], [0], [0], [1], [0, 0, 1, 1], [], []>} : vector<4x72xf32>, vector<72x256xf32>, vector<4x256xf32> -> vector<4x256xf32>
    %c1_56 = arith.constant 1 : index
    %c0_57 = arith.constant 0 : index
    %c0_58 = arith.constant 0 : index
    %70 = vector.load %arg6[%c1_56, %c0_57, %c0_58] : memref<4x4x1xf32, #tpu.memory_space<vmem>>, vector<1x4x1xf32>
    %71 = vector.shape_cast %70 : vector<1x4x1xf32> to vector<4x1xf32>
    %72 = vector.broadcast %71 : vector<4x1xf32> to vector<4x256xf32>
    %73 = arith.addf %69, %72 : vector<4x256xf32>
    %74 = arith.negf %73 : vector<4x256xf32>
    %75 = math.exp %74 : vector<4x256xf32>
    %cst_59 = arith.constant 1.000000e+00 : f32
    %76 = vector.broadcast %cst_59 : f32 to vector<4x256xf32>
    %77 = arith.addf %76, %75 : vector<4x256xf32>
    %78 = arith.divf %76, %77 : vector<4x256xf32>
    %79 = arith.mulf %73, %78 : vector<4x256xf32>
    %80 = arith.addf %79, %18 : vector<4x256xf32>
    %c2 = arith.constant 2 : index
    %c0_60 = arith.constant 0 : index
    %c0_61 = arith.constant 0 : index
    %81 = vector.load %arg7[%c2, %c0_60, %c0_61] : memref<4x8x4xf32, #tpu.memory_space<vmem>>, vector<1x8x4xf32>
    %82 = vector.shape_cast %81 : vector<1x8x4xf32> to vector<8x4xf32>
    %cst_62 = arith.constant dense<0.000000e+00> : vector<8x256xf32>
    %83 = tpu.matmul %82, %80, %cst_62 {dimension_numbers = #tpu.dot_dimension_numbers<[1], [0], [0], [1], [0, 0, 1, 1], [], []>} : vector<8x4xf32>, vector<4x256xf32>, vector<8x256xf32> -> vector<8x256xf32>
    %84 = arith.addf %25, %83 : vector<8x256xf32>
    %85 = vector.broadcast %4 : vector<1x256xf32> to vector<4x256xf32>
    %86 = arith.mulf %80, %85 : vector<4x256xf32>
    %87 = vector.broadcast %5 : vector<1x256xf32> to vector<4x256xf32>
    %88 = arith.mulf %80, %87 : vector<4x256xf32>
    %c0_63 = arith.constant 0 : index
    %c145_64 = arith.constant 145 : index
    %89 = vector.load %arg10[%c0_63, %c145_64] : memref<72x512xf32, #tpu.memory_space<vmem>>, vector<4x256xf32>
    tpu.vector_store %arg10[%c0_63, %c145_64], %86 {strides = array<i32>} : memref<72x512xf32, #tpu.memory_space<vmem>>, vector<4x256xf32>,
    %c8_65 = arith.constant 8 : index
    %c144_66 = arith.constant 144 : index
    %90 = vector.load %arg10[%c8_65, %c144_66] : memref<72x512xf32, #tpu.memory_space<vmem>>, vector<4x256xf32>
    tpu.vector_store %arg10[%c8_65, %c144_66], %80 {strides = array<i32>} : memref<72x512xf32, #tpu.memory_space<vmem>>, vector<4x256xf32>,
    %c16_67 = arith.constant 16 : index
    %c143_68 = arith.constant 143 : index
    %91 = vector.load %arg10[%c16_67, %c143_68] : memref<72x512xf32, #tpu.memory_space<vmem>>, vector<4x256xf32>
    tpu.vector_store %arg10[%c16_67, %c143_68], %88 {strides = array<i32>} : memref<72x512xf32, #tpu.memory_space<vmem>>, vector<4x256xf32>,
    %c24_69 = arith.constant 24 : index
    %c129_70 = arith.constant 129 : index
    %92 = vector.load %arg10[%c24_69, %c129_70] : memref<72x512xf32, #tpu.memory_space<vmem>>, vector<4x256xf32>
    tpu.vector_store %arg10[%c24_69, %c129_70], %86 {strides = array<i32>} : memref<72x512xf32, #tpu.memory_space<vmem>>, vector<4x256xf32>,
    %c32_71 = arith.constant 32 : index
    %c128_72 = arith.constant 128 : index
    %93 = vector.load %arg10[%c32_71, %c128_72] : memref<72x512xf32, #tpu.memory_space<vmem>>, vector<4x256xf32>
    tpu.vector_store %arg10[%c32_71, %c128_72], %80 {strides = array<i32>} : memref<72x512xf32, #tpu.memory_space<vmem>>, vector<4x256xf32>,
    %c40_73 = arith.constant 40 : index
    %c127_74 = arith.constant 127 : index
    %94 = vector.load %arg10[%c40_73, %c127_74] : memref<72x512xf32, #tpu.memory_space<vmem>>, vector<4x256xf32>
    tpu.vector_store %arg10[%c40_73, %c127_74], %88 {strides = array<i32>} : memref<72x512xf32, #tpu.memory_space<vmem>>, vector<4x256xf32>,
    %c48_75 = arith.constant 48 : index
    %c113_76 = arith.constant 113 : index
    %95 = vector.load %arg10[%c48_75, %c113_76] : memref<72x512xf32, #tpu.memory_space<vmem>>, vector<4x256xf32>
    tpu.vector_store %arg10[%c48_75, %c113_76], %86 {strides = array<i32>} : memref<72x512xf32, #tpu.memory_space<vmem>>, vector<4x256xf32>,
    %c56_77 = arith.constant 56 : index
    %c112_78 = arith.constant 112 : index
    %96 = vector.load %arg10[%c56_77, %c112_78] : memref<72x512xf32, #tpu.memory_space<vmem>>, vector<4x256xf32>
    tpu.vector_store %arg10[%c56_77, %c112_78], %80 {strides = array<i32>} : memref<72x512xf32, #tpu.memory_space<vmem>>, vector<4x256xf32>,
    %c64_79 = arith.constant 64 : index
    %c111_80 = arith.constant 111 : index
    %97 = vector.load %arg10[%c64_79, %c111_80] : memref<72x512xf32, #tpu.memory_space<vmem>>, vector<4x256xf32>
    tpu.vector_store %arg10[%c64_79, %c111_80], %88 {strides = array<i32>} : memref<72x512xf32, #tpu.memory_space<vmem>>, vector<4x256xf32>,
    %c0_81 = arith.constant 0 : index
    %c128_82 = arith.constant 128 : index
    %98 = vector.load %arg10[%c0_81, %c128_82] : memref<72x512xf32, #tpu.memory_space<vmem>>, vector<72x256xf32>
    %c2_83 = arith.constant 2 : index
    %c0_84 = arith.constant 0 : index
    %c0_85 = arith.constant 0 : index
    %99 = vector.load %arg5[%c2_83, %c0_84, %c0_85] : memref<4x4x72xf32, #tpu.memory_space<vmem>>, vector<1x4x72xf32>
    %100 = vector.shape_cast %99 : vector<1x4x72xf32> to vector<4x72xf32>
    %cst_86 = arith.constant dense<0.000000e+00> : vector<4x256xf32>
    %101 = tpu.matmul %100, %98, %cst_86 {dimension_numbers = #tpu.dot_dimension_numbers<[1], [0], [0], [1], [0, 0, 1, 1], [], []>} : vector<4x72xf32>, vector<72x256xf32>, vector<4x256xf32> -> vector<4x256xf32>
    %c2_87 = arith.constant 2 : index
    %c0_88 = arith.constant 0 : index
    %c0_89 = arith.constant 0 : index
    %102 = vector.load %arg6[%c2_87, %c0_88, %c0_89] : memref<4x4x1xf32, #tpu.memory_space<vmem>>, vector<1x4x1xf32>
    %103 = vector.shape_cast %102 : vector<1x4x1xf32> to vector<4x1xf32>
    %104 = vector.broadcast %103 : vector<4x1xf32> to vector<4x256xf32>
    %105 = arith.addf %101, %104 : vector<4x256xf32>
    %106 = arith.negf %105 : vector<4x256xf32>
    %107 = math.exp %106 : vector<4x256xf32>
    %cst_90 = arith.constant 1.000000e+00 : f32
    %108 = vector.broadcast %cst_90 : f32 to vector<4x256xf32>
    %109 = arith.addf %108, %107 : vector<4x256xf32>
    %110 = arith.divf %108, %109 : vector<4x256xf32>
    %111 = arith.mulf %105, %110 : vector<4x256xf32>
    %112 = vector.broadcast %4 : vector<1x256xf32> to vector<4x256xf32>
    %113 = arith.mulf %111, %112 : vector<4x256xf32>
    %114 = vector.broadcast %5 : vector<1x256xf32> to vector<4x256xf32>
    %115 = arith.mulf %111, %114 : vector<4x256xf32>
    %c0_91 = arith.constant 0 : index
    %c145_92 = arith.constant 145 : index
    %116 = vector.load %arg10[%c0_91, %c145_92] : memref<72x512xf32, #tpu.memory_space<vmem>>, vector<4x256xf32>
    tpu.vector_store %arg10[%c0_91, %c145_92], %113 {strides = array<i32>} : memref<72x512xf32, #tpu.memory_space<vmem>>, vector<4x256xf32>,
    %c8_93 = arith.constant 8 : index
    %c144_94 = arith.constant 144 : index
    %117 = vector.load %arg10[%c8_93, %c144_94] : memref<72x512xf32, #tpu.memory_space<vmem>>, vector<4x256xf32>
    tpu.vector_store %arg10[%c8_93, %c144_94], %111 {strides = array<i32>} : memref<72x512xf32, #tpu.memory_space<vmem>>, vector<4x256xf32>,
    %c16_95 = arith.constant 16 : index
    %c143_96 = arith.constant 143 : index
    %118 = vector.load %arg10[%c16_95, %c143_96] : memref<72x512xf32, #tpu.memory_space<vmem>>, vector<4x256xf32>
    tpu.vector_store %arg10[%c16_95, %c143_96], %115 {strides = array<i32>} : memref<72x512xf32, #tpu.memory_space<vmem>>, vector<4x256xf32>,
    %c24_97 = arith.constant 24 : index
    %c129_98 = arith.constant 129 : index
    %119 = vector.load %arg10[%c24_97, %c129_98] : memref<72x512xf32, #tpu.memory_space<vmem>>, vector<4x256xf32>
    tpu.vector_store %arg10[%c24_97, %c129_98], %113 {strides = array<i32>} : memref<72x512xf32, #tpu.memory_space<vmem>>, vector<4x256xf32>,
    %c32_99 = arith.constant 32 : index
    %c128_100 = arith.constant 128 : index
    %120 = vector.load %arg10[%c32_99, %c128_100] : memref<72x512xf32, #tpu.memory_space<vmem>>, vector<4x256xf32>
    tpu.vector_store %arg10[%c32_99, %c128_100], %111 {strides = array<i32>} : memref<72x512xf32, #tpu.memory_space<vmem>>, vector<4x256xf32>,
    %c40_101 = arith.constant 40 : index
    %c127_102 = arith.constant 127 : index
    %121 = vector.load %arg10[%c40_101, %c127_102] : memref<72x512xf32, #tpu.memory_space<vmem>>, vector<4x256xf32>
    tpu.vector_store %arg10[%c40_101, %c127_102], %115 {strides = array<i32>} : memref<72x512xf32, #tpu.memory_space<vmem>>, vector<4x256xf32>,
    %c48_103 = arith.constant 48 : index
    %c113_104 = arith.constant 113 : index
    %122 = vector.load %arg10[%c48_103, %c113_104] : memref<72x512xf32, #tpu.memory_space<vmem>>, vector<4x256xf32>
    tpu.vector_store %arg10[%c48_103, %c113_104], %113 {strides = array<i32>} : memref<72x512xf32, #tpu.memory_space<vmem>>, vector<4x256xf32>,
    %c56_105 = arith.constant 56 : index
    %c112_106 = arith.constant 112 : index
    %123 = vector.load %arg10[%c56_105, %c112_106] : memref<72x512xf32, #tpu.memory_space<vmem>>, vector<4x256xf32>
    tpu.vector_store %arg10[%c56_105, %c112_106], %111 {strides = array<i32>} : memref<72x512xf32, #tpu.memory_space<vmem>>, vector<4x256xf32>,
    %c64_107 = arith.constant 64 : index
    %c111_108 = arith.constant 111 : index
    %124 = vector.load %arg10[%c64_107, %c111_108] : memref<72x512xf32, #tpu.memory_space<vmem>>, vector<4x256xf32>
    tpu.vector_store %arg10[%c64_107, %c111_108], %115 {strides = array<i32>} : memref<72x512xf32, #tpu.memory_space<vmem>>, vector<4x256xf32>,
    %c0_109 = arith.constant 0 : index
    %c128_110 = arith.constant 128 : index
    %125 = vector.load %arg10[%c0_109, %c128_110] : memref<72x512xf32, #tpu.memory_space<vmem>>, vector<72x256xf32>
    %c3 = arith.constant 3 : index
    %c0_111 = arith.constant 0 : index
    %c0_112 = arith.constant 0 : index
    %126 = vector.load %arg5[%c3, %c0_111, %c0_112] : memref<4x4x72xf32, #tpu.memory_space<vmem>>, vector<1x4x72xf32>
    %127 = vector.shape_cast %126 : vector<1x4x72xf32> to vector<4x72xf32>
    %cst_113 = arith.constant dense<0.000000e+00> : vector<4x256xf32>
    %128 = tpu.matmul %127, %125, %cst_113 {dimension_numbers = #tpu.dot_dimension_numbers<[1], [0], [0], [1], [0, 0, 1, 1], [], []>} : vector<4x72xf32>, vector<72x256xf32>, vector<4x256xf32> -> vector<4x256xf32>
    %c3_114 = arith.constant 3 : index
    %c0_115 = arith.constant 0 : index
    %c0_116 = arith.constant 0 : index
    %129 = vector.load %arg6[%c3_114, %c0_115, %c0_116] : memref<4x4x1xf32, #tpu.memory_space<vmem>>, vector<1x4x1xf32>
    %130 = vector.shape_cast %129 : vector<1x4x1xf32> to vector<4x1xf32>
    %131 = vector.broadcast %130 : vector<4x1xf32> to vector<4x256xf32>
    %132 = arith.addf %128, %131 : vector<4x256xf32>
    %133 = arith.negf %132 : vector<4x256xf32>
    %134 = math.exp %133 : vector<4x256xf32>
    %cst_117 = arith.constant 1.000000e+00 : f32
    %135 = vector.broadcast %cst_117 : f32 to vector<4x256xf32>
    %136 = arith.addf %135, %134 : vector<4x256xf32>
    %137 = arith.divf %135, %136 : vector<4x256xf32>
    %138 = arith.mulf %132, %137 : vector<4x256xf32>
    %139 = arith.addf %138, %80 : vector<4x256xf32>
    %c3_118 = arith.constant 3 : index
    %c0_119 = arith.constant 0 : index
    %c0_120 = arith.constant 0 : index
    %140 = vector.load %arg7[%c3_118, %c0_119, %c0_120] : memref<4x8x4xf32, #tpu.memory_space<vmem>>, vector<1x8x4xf32>
    %141 = vector.shape_cast %140 : vector<1x8x4xf32> to vector<8x4xf32>
    %cst_121 = arith.constant dense<0.000000e+00> : vector<8x256xf32>
    %142 = tpu.matmul %141, %139, %cst_121 {dimension_numbers = #tpu.dot_dimension_numbers<[1], [0], [0], [1], [0, 0, 1, 1], [], []>} : vector<8x4xf32>, vector<4x256xf32>, vector<8x256xf32> -> vector<8x256xf32>
    %143 = arith.addf %84, %142 : vector<8x256xf32>
    %c0_122 = arith.constant 0 : index
    %c0_123 = arith.constant 0 : index
    %144 = vector.load %arg8[%c0_122, %c0_123] : memref<8x1xf32, #tpu.memory_space<vmem>>, vector<8x1xf32>
    %145 = vector.broadcast %144 : vector<8x1xf32> to vector<8x256xf32>
    %146 = arith.addf %143, %145 : vector<8x256xf32>
    %147 = arith.negf %146 : vector<8x256xf32>
    %148 = math.exp %147 : vector<8x256xf32>
    %cst_124 = arith.constant 1.000000e+00 : f32
    %149 = vector.broadcast %cst_124 : f32 to vector<8x256xf32>
    %150 = arith.addf %149, %148 : vector<8x256xf32>
    %151 = arith.divf %149, %150 : vector<8x256xf32>
    %152 = arith.mulf %146, %151 : vector<8x256xf32>
    %c0_125 = arith.constant 0 : index
    %c0_126 = arith.constant 0 : index
    %c0_127 = arith.constant 0 : index
    %153 = vector.load %arg9[%c0_125, %c0_126, %c0_127] : memref<1x8x256xf32, #tpu.memory_space<vmem>>, vector<1x8x256xf32>
    %154 = vector.shape_cast %153 : vector<1x8x256xf32> to vector<8x256xf32>
    %155 = vector.shape_cast %152 : vector<8x256xf32> to vector<1x8x256xf32>
    tpu.vector_store %arg9[%c0_125, %c0_126, %c0_127], %155 {strides = array<i32>} : memref<1x8x256xf32, #tpu.memory_space<vmem>>, vector<1x8x256xf32>,
    return
  }
  func.func @transform_0(%arg0: i32) -> (i32, i32, i32) {
    %c0_i32 = arith.constant 0 : i32
    %c0_i32_0 = arith.constant 0 : i32
    %c0_i32_1 = arith.constant 0 : i32
    return %arg0, %c0_i32, %c0_i32_0 : i32, i32, i32
  }
  func.func @transform_1(%arg0: i32) -> (i32, i32) {
    %c0_i32 = arith.constant 0 : i32
    %c0_i32_0 = arith.constant 0 : i32
    %c0_i32_1 = arith.constant 0 : i32
    return %c0_i32, %c0_i32_0 : i32, i32
  }
  func.func @transform_2(%arg0: i32) -> (i32, i32) {
    %c0_i32 = arith.constant 0 : i32
    %c0_i32_0 = arith.constant 0 : i32
    %c0_i32_1 = arith.constant 0 : i32
    return %c0_i32, %c0_i32_0 : i32, i32
  }
  func.func @transform_3(%arg0: i32) -> (i32, i32) {
    %c0_i32 = arith.constant 0 : i32
    %c0_i32_0 = arith.constant 0 : i32
    %c0_i32_1 = arith.constant 0 : i32
    return %c0_i32, %c0_i32_0 : i32, i32
  }
  func.func @transform_4(%arg0: i32) -> (i32, i32, i32) {
    %c0_i32 = arith.constant 0 : i32
    %c0_i32_0 = arith.constant 0 : i32
    %c0_i32_1 = arith.constant 0 : i32
    %c0_i32_2 = arith.constant 0 : i32
    return %c0_i32, %c0_i32_0, %c0_i32_1 : i32, i32, i32
  }
  func.func @transform_5(%arg0: i32) -> (i32, i32, i32) {
    %c0_i32 = arith.constant 0 : i32
    %c0_i32_0 = arith.constant 0 : i32
    %c0_i32_1 = arith.constant 0 : i32
    %c0_i32_2 = arith.constant 0 : i32
    return %c0_i32, %c0_i32_0, %c0_i32_1 : i32, i32, i32
  }
  func.func @transform_6(%arg0: i32) -> (i32, i32, i32) {
    %c0_i32 = arith.constant 0 : i32
    %c0_i32_0 = arith.constant 0 : i32
    %c0_i32_1 = arith.constant 0 : i32
    %c0_i32_2 = arith.constant 0 : i32
    return %c0_i32, %c0_i32_0, %c0_i32_1 : i32, i32, i32
  }
  func.func @transform_7(%arg0: i32) -> (i32, i32) {
    %c0_i32 = arith.constant 0 : i32
    %c0_i32_0 = arith.constant 0 : i32
    %c0_i32_1 = arith.constant 0 : i32
    return %c0_i32, %c0_i32_0 : i32, i32
  }
  func.func @transform_8(%arg0: i32) -> (i32, i32, i32) {
    %c0_i32 = arith.constant 0 : i32
    %c0_i32_0 = arith.constant 0 : i32
    %c0_i32_1 = arith.constant 0 : i32
    return %arg0, %c0_i32, %c0_i32_0 : i32, i32, i32
  }
}

</mosaic_0001>

<llo_original>
// kernel: tpu_custom_call.1
$region0: #{tpu_custom_call.1}
  #allocation0 [shape = 'u32[]', space=smem, size = 0x4, offset = 0x4, fixed_abs, tag = 'smem constant byte address 0x4 - core index']
  #allocation1 [shape = 'u32[144,128]{1,0:T(1,128)}', space=vmem, size = 0x12000, scoped, tag = 'internal scratch']
  #allocation2 [shape = 'f32[72,512]{1,0:T(8,128)}', space=vmem, size = 0x24000, scoped, tag = 'scratch operand']
  %s0 = inlined_call_operand.vmem [shape: f32[2,4,256], index: 0, kind: input, shape index: {}]
  %s1 = inlined_call_operand.vmem [shape: f32[2,256], index: 1, kind: input, shape index: {}]
  %s2 = inlined_call_operand.vmem [shape: f32[8,4], index: 2, kind: input, shape index: {}]
  %s3 = inlined_call_operand.vmem [shape: f32[8,1], index: 3, kind: input, shape index: {}]
  %s4 = inlined_call_operand.vmem [shape: f32[4,4,72], index: 4, kind: input, shape index: {}]
  %s5 = inlined_call_operand.vmem [shape: f32[4,4,1], index: 5, kind: input, shape index: {}]
  %s6 = inlined_call_operand.vmem [shape: f32[4,8,4], index: 6, kind: input, shape index: {}]
  %s7 = inlined_call_operand.vmem [shape: f32[8,1], index: 7, kind: input, shape index: {}]
  %s8 = inlined_call_operand.hbm [shape: f32[2,8,256], index: 8, kind: output, shape index: {}]
  %s9 = sld [smem:[#allocation0]]
  $region65: #{tpu_custom_call.1} parent=0
    _
  %s11 = ssub.s32 1, %s9
  %s12 = scalar_select 0, %s11, %s9
  $region1: #{tpu_custom_call.1} parent=0
    #allocation3 [shape = 'u8[16384]{0}', space=vmem, size = 0x4000, scoped, tag = 'output window, operand 0']
    #allocation4 [shape = 's32[2]{0}', space=sflag, size = 0x8, scoped, tag = 'scoped memory for tpu_custom_call.1']
    %13 = vsyncpa [#allocation4], 0
    %s14 = scalar_lea.sflag [#allocation4], 1
    %15 = vsyncpa %s14, 0
    loop: start=0, step=1, limit=4
    $region2: #{tpu_custom_call.1} parent=1 // loop_pre_header
      _
    $region3: #{tpu_custom_call.1} parent=1 // loop_header
      %s17 = sphi 0, %s21
      %p18 = scmp.ge.s32.totalorder %s17, 4
      %s27 = sphi 0, %s29
      %s30 = sphi 0, %s27
      %s31 = sphi 0, %s30
      %s47 = sphi 0, %s31
      %s51 = sphi 0, %s51
      %s53 = sphi 0, %s51
      %s54 = sphi 0, %s53
      %s68 = sphi 0, %s54
      %s72 = sphi 0, %s72
      %s74 = sphi 0, %s72
      %s75 = sphi 0, %s74
      %s89 = sphi 0, %s75
      %s93 = sphi 0, %s93
      %s95 = sphi 0, %s93
      %s96 = sphi 0, %s95
      %s110 = sphi 0, %s96
      %s114 = sphi 0, %s114
      %s116 = sphi 0, %s114
      %s117 = sphi 0, %s116
      %s131 = sphi 0, %s117
      %s135 = sphi 0, %s135
      %s137 = sphi 0, %s135
      %s138 = sphi 0, %s137
      %s152 = sphi 0, %s138
      %s156 = sphi 0, %s156
      %s158 = sphi 0, %s156
      %s159 = sphi 0, %s158
      %s173 = sphi 0, %s159
      %s177 = sphi 0, %s177
      %s179 = sphi 0, %s177
      %s180 = sphi 0, %s179
      %s194 = sphi 0, %s180
      %s200 = sphi 0, %s202
      %s203 = sphi 0, %s200
      %s204 = sphi 0, %s203
      %s220 = sphi 0, %s204
    $region4: #{tpu_custom_call.1} parent=1 // loop_header_branch
      %20 = sbr.rel (%p18) target = $region8
    $region5: #{tpu_custom_call.1} parent=1 // loop_body
      %s22 = ssub.s32 %s17, 1
      %s23 = ssub.s32 %s17, 2
      %s24 = sadd.s32 %s17, 1
      %s25 = ssub.s32 %s17, %s24
      %p26 = scmp.eq.s32.totalorder %s25, 0
      %s28 = sadd.s32 %s27, 1
      %s29 = scalar_select %p26, %s27, %s28
      %p32 = pneg %p26
      %p33 = scmp.eq.s32.totalorder %s17, 1
      %p34 = por %p32, %p33
      %p35 = scmp.ne.s32.totalorder %s27, %s30
      %p36 = scmp.eq.s32.totalorder %s17, 0
      %p37 = por %p35, %p36
      %p38 = scmp.ne.s32.totalorder %s27, %s30
      %p39 = scmp.eq.s32.totalorder %s22, 1
      %p40 = por %p38, %p39
      %p41 = scmp.ne.s32.totalorder %s30, %s31
      %p42 = scmp.eq.s32.totalorder %s22, 0
      %p43 = por %p41, %p42
      %p44 = scmp.ne.s32.totalorder %s30, %s31
      %p45 = scmp.eq.s32.totalorder %s23, 1
      %p46 = por %p44, %p45
      %p48 = scmp.ne.s32.totalorder %s31, %s47
      %p49 = scmp.eq.s32.totalorder %s23, 0
      %p50 = por %p48, %p49
      %s52 = sadd.s32 %s51, 1
      %p55 = scmp.eq.s32.totalorder %s17, 1
      %p56 = scmp.ne.s32.totalorder %s51, %s53
      %p57 = scmp.eq.s32.totalorder %s17, 0
      %p58 = por %p56, %p57
      %p59 = scmp.ne.s32.totalorder %s51, %s53
      %p60 = scmp.eq.s32.totalorder %s22, 1
      %p61 = por %p59, %p60
      %p62 = scmp.ne.s32.totalorder %s53, %s54
      %p63 = scmp.eq.s32.totalorder %s22, 0
      %p64 = por %p62, %p63
      %p65 = scmp.ne.s32.totalorder %s53, %s54
      %p66 = scmp.eq.s32.totalorder %s23, 1
      %p67 = por %p65, %p66
      %p69 = scmp.ne.s32.totalorder %s54, %s68
      %p70 = scmp.eq.s32.totalorder %s23, 0
      %p71 = por %p69, %p70
      %s73 = sadd.s32 %s72, 1
      %p76 = scmp.eq.s32.totalorder %s17, 1
      %p77 = scmp.ne.s32.totalorder %s72, %s74
      %p78 = scmp.eq.s32.totalorder %s17, 0
      %p79 = por %p77, %p78
      %p80 = scmp.ne.s32.totalorder %s72, %s74
      %p81 = scmp.eq.s32.totalorder %s22, 1
      %p82 = por %p80, %p81
      %p83 = scmp.ne.s32.totalorder %s74, %s75
      %p84 = scmp.eq.s32.totalorder %s22, 0
      %p85 = por %p83, %p84
      %p86 = scmp.ne.s32.totalorder %s74, %s75
      %p87 = scmp.eq.s32.totalorder %s23, 1
      %p88 = por %p86, %p87
      %p90 = scmp.ne.s32.totalorder %s75, %s89
      %p91 = scmp.eq.s32.totalorder %s23, 0
      %p92 = por %p90, %p91
      %s94 = sadd.s32 %s93, 1
      %p97 = scmp.eq.s32.totalorder %s17, 1
      %p98 = scmp.ne.s32.totalorder %s93, %s95
      %p99 = scmp.eq.s32.totalorder %s17, 0
      %p100 = por %p98, %p99
      %p101 = scmp.ne.s32.totalorder %s93, %s95
      %p102 = scmp.eq.s32.totalorder %s22, 1
      %p103 = por %p101, %p102
      %p104 = scmp.ne.s32.totalorder %s95, %s96
      %p105 = scmp.eq.s32.totalorder %s22, 0
      %p106 = por %p104, %p105
      %p107 = scmp.ne.s32.totalorder %s95, %s96
      %p108 = scmp.eq.s32.totalorder %s23, 1
      %p109 = por %p107, %p108
      %p111 = scmp.ne.s32.totalorder %s96, %s110
      %p112 = scmp.eq.s32.totalorder %s23, 0
      %p113 = por %p111, %p112
      %s115 = sadd.s32 %s114, 1
      %p118 = scmp.eq.s32.totalorder %s17, 1
      %p119 = scmp.ne.s32.totalorder %s114, %s116
      %p120 = scmp.eq.s32.totalorder %s17, 0
      %p121 = por %p119, %p120
      %p122 = scmp.ne.s32.totalorder %s114, %s116
      %p123 = scmp.eq.s32.totalorder %s22, 1
      %p124 = por %p122, %p123
      %p125 = scmp.ne.s32.totalorder %s116, %s117
      %p126 = scmp.eq.s32.totalorder %s22, 0
      %p127 = por %p125, %p126
      %p128 = scmp.ne.s32.totalorder %s116, %s117
      %p129 = scmp.eq.s32.totalorder %s23, 1
      %p130 = por %p128, %p129
      %p132 = scmp.ne.s32.totalorder %s117, %s131
      %p133 = scmp.eq.s32.totalorder %s23, 0
      %p134 = por %p132, %p133
      %s136 = sadd.s32 %s135, 1
      %p139 = scmp.eq.s32.totalorder %s17, 1
      %p140 = scmp.ne.s32.totalorder %s135, %s137
      %p141 = scmp.eq.s32.totalorder %s17, 0
      %p142 = por %p140, %p141
      %p143 = scmp.ne.s32.totalorder %s135, %s137
      %p144 = scmp.eq.s32.totalorder %s22, 1
      %p145 = por %p143, %p144
      %p146 = scmp.ne.s32.totalorder %s137, %s138
      %p147 = scmp.eq.s32.totalorder %s22, 0
      %p148 = por %p146, %p147
      %p149 = scmp.ne.s32.totalorder %s137, %s138
      %p150 = scmp.eq.s32.totalorder %s23, 1
      %p151 = por %p149, %p150
      %p153 = scmp.ne.s32.totalorder %s138, %s152
      %p154 = scmp.eq.s32.totalorder %s23, 0
      %p155 = por %p153, %p154
      %s157 = sadd.s32 %s156, 1
      %p160 = scmp.eq.s32.totalorder %s17, 1
      %p161 = scmp.ne.s32.totalorder %s156, %s158
      %p162 = scmp.eq.s32.totalorder %s17, 0
      %p163 = por %p161, %p162
      %p164 = scmp.ne.s32.totalorder %s156, %s158
      %p165 = scmp.eq.s32.totalorder %s22, 1
      %p166 = por %p164, %p165
      %p167 = scmp.ne.s32.totalorder %s158, %s159
      %p168 = scmp.eq.s32.totalorder %s22, 0
      %p169 = por %p167, %p168
      %p170 = scmp.ne.s32.totalorder %s158, %s159
      %p171 = scmp.eq.s32.totalorder %s23, 1
      %p172 = por %p170, %p171
      %p174 = scmp.ne.s32.totalorder %s159, %s173
      %p175 = scmp.eq.s32.totalorder %s23, 0
      %p176 = por %p174, %p175
      %s178 = sadd.s32 %s177, 1
      %p181 = scmp.eq.s32.totalorder %s17, 1
      %p182 = scmp.ne.s32.totalorder %s177, %s179
      %p183 = scmp.eq.s32.totalorder %s17, 0
      %p184 = por %p182, %p183
      %p185 = scmp.ne.s32.totalorder %s177, %s179
      %p186 = scmp.eq.s32.totalorder %s22, 1
      %p187 = por %p185, %p186
      %p188 = scmp.ne.s32.totalorder %s179, %s180
      %p189 = scmp.eq.s32.totalorder %s22, 0
      %p190 = por %p188, %p189
      %p191 = scmp.ne.s32.totalorder %s179, %s180
      %p192 = scmp.eq.s32.totalorder %s23, 1
      %p193 = por %p191, %p192
      %p195 = scmp.ne.s32.totalorder %s180, %s194
      %p196 = scmp.eq.s32.totalorder %s23, 0
      %p197 = por %p195, %p196
      %s198 = ssub.s32 %s17, %s24
      %p199 = scmp.eq.s32.totalorder %s198, 0
      %s201 = sadd.s32 %s200, 1
      %s202 = scalar_select %p199, %s200, %s201
      %p205 = pneg %p199
      %p206 = scmp.eq.s32.totalorder %s17, 1
      %p207 = por %p205, %p206
      %p208 = scmp.ne.s32.totalorder %s200, %s203
      %p209 = scmp.eq.s32.totalorder %s17, 0
      %p210 = por %p208, %p209
      %p211 = scmp.ne.s32.totalorder %s200, %s203
      %p212 = scmp.eq.s32.totalorder %s22, 1
      %p213 = por %p211, %p212
      %p214 = scmp.ne.s32.totalorder %s203, %s204
      %p215 = scmp.eq.s32.totalorder %s22, 0
      %p216 = por %p214, %p215
      %p217 = scmp.ne.s32.totalorder %s203, %s204
      %p218 = scmp.eq.s32.totalorder %s23, 1
      %p219 = por %p217, %p218
      %p221 = scmp.ne.s32.totalorder %s204, %s220
      %p222 = scmp.eq.s32.totalorder %s23, 0
      %p223 = por %p221, %p222
      %p224 = scmp.le.s32.totalorder 1, %s17
      %p225 = scmp.lt.s32.totalorder %s17, 3
      %p226 = pnand %p224, %p225
      %p227 = pneg %p226
      // Predicated region
      $region9: #{tpu_custom_call.1} parent=5 // pred_check
        _
      $region10: #{tpu_custom_call.1} parent=5 // pred_check_branch
        %229 = sbr.rel (%p226) target = $region12
      $region11: #{tpu_custom_call.1} parent=5 // pred_region
        %s230 = ssub.s32 %s17, 1
        // Predicated region
        $region13: #{tpu_custom_call.1} parent=11 // pred_check
          %p231 = pneg %p64
        $region14: #{tpu_custom_call.1} parent=11 // pred_check_branch
          %233 = sbr.rel (%p231) target = $region16
        $region15: #{tpu_custom_call.1} parent=11 // pred_region
          _
        $region16: #{tpu_custom_call.1} parent=11 // pred_fallthru
          _
        // Predicated region
        $region17: #{tpu_custom_call.1} parent=11 // pred_check
          %p234 = pneg %p85
        $region18: #{tpu_custom_call.1} parent=11 // pred_check_branch
          %236 = sbr.rel (%p234) target = $region20
        $region19: #{tpu_custom_call.1} parent=11 // pred_region
          _
        $region20: #{tpu_custom_call.1} parent=11 // pred_fallthru
          _
        // Predicated region
        $region21: #{tpu_custom_call.1} parent=11 // pred_check
          %p237 = pneg %p106
        $region22: #{tpu_custom_call.1} parent=11 // pred_check_branch
          %239 = sbr.rel (%p237) target = $region24
        $region23: #{tpu_custom_call.1} parent=11 // pred_region
          _
        $region24: #{tpu_custom_call.1} parent=11 // pred_fallthru
          _
        // Predicated region
        $region25: #{tpu_custom_call.1} parent=11 // pred_check
          %p240 = pneg %p127
        $region26: #{tpu_custom_call.1} parent=11 // pred_check_branch
          %242 = sbr.rel (%p240) target = $region28
        $region27: #{tpu_custom_call.1} parent=11 // pred_region
          _
        $region28: #{tpu_custom_call.1} parent=11 // pred_fallthru
          _
        // Predicated region
        $region29: #{tpu_custom_call.1} parent=11 // pred_check
          %p243 = pneg %p148
        $region30: #{tpu_custom_call.1} parent=11 // pred_check_branch
          %245 = sbr.rel (%p243) target = $region32
        $region31: #{tpu_custom_call.1} parent=11 // pred_region
          _
        $region32: #{tpu_custom_call.1} parent=11 // pred_fallthru
          _
        // Predicated region
        $region33: #{tpu_custom_call.1} parent=11 // pred_check
          %p246 = pneg %p169
        $region34: #{tpu_custom_call.1} parent=11 // pred_check_branch
          %248 = sbr.rel (%p246) target = $region36
        $region35: #{tpu_custom_call.1} parent=11 // pred_region
          _
        $region36: #{tpu_custom_call.1} parent=11 // pred_fallthru
          _
        // Predicated region
        $region37: #{tpu_custom_call.1} parent=11 // pred_check
          %p249 = pneg %p190
        $region38: #{tpu_custom_call.1} parent=11 // pred_check_branch
          %251 = sbr.rel (%p249) target = $region40
        $region39: #{tpu_custom_call.1} parent=11 // pred_region
          _
        $region40: #{tpu_custom_call.1} parent=11 // pred_fallthru
          _
      $region12: #{tpu_custom_call.1} parent=5 // pred_fallthru
        _
      %p252 = scmp.lt.s32.totalorder %s17, 2
      // Predicated region
      $region41: #{tpu_custom_call.1} parent=5 // pred_check
        %p253 = pneg %p252
      $region42: #{tpu_custom_call.1} parent=5 // pred_check_branch
        %255 = sbr.rel (%p253) target = $region44
      $region43: #{tpu_custom_call.1} parent=5 // pred_region
        // Predicated region
        $region45: #{tpu_custom_call.1} parent=43 // pred_check
          %p256 = pneg %p37
        $region46: #{tpu_custom_call.1} parent=43 // pred_check_branch
          %258 = sbr.rel (%p256) target = $region48
        $region47: #{tpu_custom_call.1} parent=43 // pred_region
          %p259 = scmp.lt.s32.totalorder %s17, 1
          %s260 = scalar_select %p259, %s17, 1
          %s261 = smul.addr %s260, 2
          %s262 = smul.addr %s261, 4
          %s263 = scalar_lea.vmem %s0, %s262
        $region48: #{tpu_custom_call.1} parent=43 // pred_fallthru
          _
      $region44: #{tpu_custom_call.1} parent=5 // pred_fallthru
        _
      %p264 = scmp.le.s32.totalorder 1, %s17
      %p265 = scmp.lt.s32.totalorder %s17, 3
      %p266 = pnand %p264, %p265
      %p267 = pneg %p266
      // Predicated region
      $region49: #{tpu_custom_call.1} parent=5 // pred_check
        _
      $region50: #{tpu_custom_call.1} parent=5 // pred_check_branch
        %269 = sbr.rel (%p266) target = $region52
      $region51: #{tpu_custom_call.1} parent=5 // pred_region
        %s270 = ssub.s32 %s17, 1
        %p271 = scmp.lt.s32.totalorder %s22, 1
        %s272 = scalar_select %p271, %s22, 1
        %s273 = smul.addr %s272, 2
        %s274 = smul.addr %s273, 4
        %s275 = scalar_lea.vmem %s0, %s274
        %p276 = pneg %p43
        %p277 = pneg %p40
        %p278 = pneg %p64
        %p279 = pneg %p61
        %p280 = pneg %p85
        %p281 = pneg %p82
        %p282 = pneg %p106
        %p283 = pneg %p103
        %p284 = pneg %p127
        %p285 = pneg %p124
        %p286 = pneg %p148
        %p287 = pneg %p145
        %p288 = pneg %p169
        %p289 = pneg %p166
        %p290 = pneg %p190
        %p291 = pneg %p187
        %p292 = pneg %p216
        %p293 = pneg %p213
        %s294 = sand.u32 %s203, 1
        %s295 = scalar_lea.sflag [#allocation4], %s294
        %s296 = sand.u32 %s203, 1
        %s297 = smul.addr %s296, 16
        %s298 = scalar_lea.vmem [#allocation3], %s297
        %p299 = scmp.lt.s32.totalorder %s22, 1
        %s300 = scalar_select %p299, %s22, 1
        %s301 = smul.addr %s300, 2
        %s302 = smul.addr %s301, 4
        %s303 = scalar_lea.vmem %s0, %s302
        %304 = vst [vmem:[#allocation2] sm:$0xff] 0.0
        %305 = vst [vmem:[#allocation2 + $0x8] sm:$0xff] 0.0
        %306 = vst [vmem:[#allocation2 + $0x10] sm:$0xff] 0.0
        %307 = vst [vmem:[#allocation2 + $0x18] sm:$0xff] 0.0
        %308 = vst [vmem:[#allocation2 + $0x20] sm:$0xff] 0.0
        %309 = vst [vmem:[#allocation2 + $0x28] sm:$0xff] 0.0
        %310 = vst [vmem:[#allocation2 + $0x30] sm:$0xff] 0.0
        %311 = vst [vmem:[#allocation2 + $0x38] sm:$0xff] 0.0
        %312 = vst [vmem:[#allocation2 + $0x40] sm:$0xff] 0.0
        %313 = vst [vmem:[#allocation2 + $0x48] sm:$0xff] 0.0
        %314 = vst [vmem:[#allocation2 + $0x50] sm:$0xff] 0.0
        %315 = vst [vmem:[#allocation2 + $0x58] sm:$0xff] 0.0
        %316 = vst [vmem:[#allocation2 + $0x60] sm:$0xff] 0.0
        %317 = vst [vmem:[#allocation2 + $0x68] sm:$0xff] 0.0
        %318 = vst [vmem:[#allocation2 + $0x70] sm:$0xff] 0.0
        %319 = vst [vmem:[#allocation2 + $0x78] sm:$0xff] 0.0
        %320 = vst [vmem:[#allocation2 + $0x80] sm:$0xff] 0.0
        %321 = vst [vmem:[#allocation2 + $0x88] sm:$0xff] 0.0
        %322 = vst [vmem:[#allocation2 + $0x90] sm:$0xff] 0.0
        %323 = vst [vmem:[#allocation2 + $0x98] sm:$0xff] 0.0
        %324 = vst [vmem:[#allocation2 + $0xa0] sm:$0xff] 0.0
        %325 = vst [vmem:[#allocation2 + $0xa8] sm:$0xff] 0.0
        %326 = vst [vmem:[#allocation2 + $0xb0] sm:$0xff] 0.0
        %327 = vst [vmem:[#allocation2 + $0xb8] sm:$0xff] 0.0
        %328 = vst [vmem:[#allocation2 + $0xc0] sm:$0xff] 0.0
        %329 = vst [vmem:[#allocation2 + $0xc8] sm:$0xff] 0.0
        %330 = vst [vmem:[#allocation2 + $0xd0] sm:$0xff] 0.0
        %331 = vst [vmem:[#allocation2 + $0xd8] sm:$0xff] 0.0
        %332 = vst [vmem:[#allocation2 + $0xe0] sm:$0xff] 0.0
        %333 = vst [vmem:[#allocation2 + $0xe8] sm:$0xff] 0.0
        %334 = vst [vmem:[#allocation2 + $0xf0] sm:$0xff] 0.0
        %335 = vst [vmem:[#allocation2 + $0xf8] sm:$0xff] 0.0
        %336 = vst [vmem:[#allocation2 + $0x100] sm:$0xff] 0.0
        %337 = vst [vmem:[#allocation2 + $0x108] sm:$0xff] 0.0
        %338 = vst [vmem:[#allocation2 + $0x110] sm:$0xff] 0.0
        %339 = vst [vmem:[#allocation2 + $0x118] sm:$0xff] 0.0
        %v340 = vld [vmem:[%s303] sm:$0xff]
        %v341 = vld [vmem:[%s1] ss:$2 sm:$0x3]
        %s342 = scalar_lea.vmem %s1, 1
        %v343 = vld [vmem:[%s342] ss:$2 sm:$0x3]
        %v344 = vld [vmem:[%s2] sm:$0xff]
        %v345 = vld [vmem:[%s3] sm:$0xff]
        %347 = vset.pattern.permute.xlu0 0
        %348 = vperm.xlu0 %347, %v345
        %v349 = vpop.permute.xlu0 %348
        %v352 = vcombine.high %v340, %v340
        %vm353 = vcmask 31744
        %v355 = vsel %vm353, %v344, 0
        %vm357 = vcmask 1043456
        %v358 = vsel %vm357, %v340, 0
        %v360 = vsel %vm357, %v352, 0
        %362 = vmatprep.subr.mxu0 %v360
        %363 = vmatpush1.msra.mxu0 %v358
        %364 = vmatprep.subr.mxu0 0.0
        %365 = vmatpush1.msra.mxu0 0.0
        %366 = vmatprep.subr.mxu0 0.0
        %367 = vmatpush1.msra.mxu0 0.0
        %368 = vmatprep.subr.mxu0 0.0
        %369 = vmatpush1.msra.mxu0 0.0
        %370 = vmatprep.subr.mxu0 0.0
        %371 = vmatpush1.msra.mxu0 0.0
        %372 = vmatprep.subr.mxu0 0.0
        %373 = vmatpush1.msra.mxu0 0.0
        %374 = vmatprep.subr.mxu0 0.0
        %375 = vmatpush1.msra.mxu0 0.0
        %376 = vmatprep.subr.mxu0 0.0
        %377 = vmatpush1.msra.mxu0 0.0
        %378 = vmatprep.subr.mxu0 0.0
        %379 = vmatpush1.msra.mxu0 0.0
        %380 = vmatprep.subr.mxu0 0.0
        %381 = vmatpush1.msra.mxu0 0.0
        %382 = vmatprep.subr.mxu0 0.0
        %383 = vmatpush1.msra.mxu0 0.0
        %384 = vmatprep.subr.mxu0 0.0
        %385 = vmatpush1.msra.mxu0 0.0
        %386 = vmatprep.subr.mxu0 0.0
        %387 = vmatpush1.msra.mxu0 0.0
        %388 = vmatprep.subr.mxu0 0.0
        %389 = vmatpush1.msra.mxu0 0.0
        %390 = vmatprep.subr.mxu0 0.0
        %391 = vmatpush1.msra.mxu0 0.0
        %392 = vmatprep.subr.mxu0 0.0
        %393 = vmatpush1.msra.mxu0 0.0
        %394 = vmatprep.subr.mxu0 0.0
        %395 = vmatpush1.msra.mxu0 0.0
        %396 = vmatprep.subr.mxu0 0.0
        %397 = vmatpush1.msra.mxu0 0.0
        %398 = vmatprep.subr.mxu0 0.0
        %399 = vmatpush1.msra.mxu0 0.0
        %400 = vmatprep.subr.mxu0 0.0
        %401 = vmatpush1.msra.mxu0 0.0
        %402 = vmatprep.subr.mxu0 0.0
        %403 = vmatpush1.msra.mxu0 0.0
        %404 = vmatprep.subr.mxu0 0.0
        %405 = vmatpush1.msra.mxu0 0.0
        %406 = vmatprep.subr.mxu0 0.0
        %407 = vmatpush1.msra.mxu0 0.0
        %408 = vmatprep.subr.mxu0 0.0
        %409 = vmatpush1.msra.mxu0 0.0
        %410 = vmatprep.subr.mxu0 0.0
        %411 = vmatpush1.msra.mxu0 0.0
        %412 = vmatprep.subr.mxu0 0.0
        %413 = vmatpush1.msra.mxu0 0.0
        %414 = vmatprep.subr.mxu0 0.0
        %415 = vmatpush1.msra.mxu0 0.0
        %416 = vmatprep.subr.mxu0 0.0
        %417 = vmatpush1.msra.mxu0 0.0
        %418 = vmatprep.subr.mxu0 0.0
        %419 = vmatpush1.msra.mxu0 0.0
        %420 = vmatprep.subr.mxu0 0.0
        %421 = vmatpush1.msra.mxu0 0.0
        %422 = vmatprep.subr.mxu0 0.0
        %423 = vmatpush1.msra.mxu0 0.0
        %424 = vmatprep.subr.mxu0 0.0
        %425 = vmatpush1.msra.mxu0 0.0
        %426 = vmatprep.mubr.f32.mxu0 0.0
        %427 = vmatmul.mubr.f32.gmra.mrb[0].mxu0 %v355
        %v428 = vpop.f32.mrb[0].mxu0
        %v429 = vadd.f32 %v349, %v428
        %v430 = vpop.f32.mrb[0].mxu0
        %v431 = vadd.f32 %v349, %v430
        %432 = vdwg.mxu0
        %v433 = vxor.u32 %v429, 2147483648
        %v434 = vxor.u32 %v431, 2147483648
        %v435 = vmul.f32 %v433, 1.442695
        %v436 = vpow.pop %v435
        %v437 = vmul.f32 %v434, 1.442695
        %v438 = vpow.pop %v437
        %v439 = vadd.f32 %v436, 1.0
        %v440 = vadd.f32 %v438, 1.0
        %v441 = vrcp.pop %v439
        %v442 = vmul.f32 1.0, %v441
        %v443 = vrcp.pop %v440
        %v444 = vmul.f32 1.0, %v443
        %v445 = vmul.f32 %v429, %v442
        %v446 = vmul.f32 %v431, %v444
        %v447 = vld [vmem:[%s6] sm:$0xff]
        %s448 = scalar_lea.vmem %s6, 8
        %v449 = vld [vmem:[%s448] sm:$0xff]
        %v452 = vrot.slane %v445, 4
        %v453 = vrot.slane %v446, 4
        %v455 = vsel %vm353, %v449, 0
        %v457 = vsel %vm357, %v452, 0
        %v459 = vsel %vm357, %v453, 0
        %461 = vmatprep.subr.mxu0 %v459
        %462 = vmatpush1.msra.mxu0 %v457
        %463 = vmatprep.subr.mxu0 0.0
        %464 = vmatpush1.msra.mxu0 0.0
        %465 = vmatprep.subr.mxu0 0.0
        %466 = vmatpush1.msra.mxu0 0.0
        %467 = vmatprep.subr.mxu0 0.0
        %468 = vmatpush1.msra.mxu0 0.0
        %469 = vmatprep.subr.mxu0 0.0
        %470 = vmatpush1.msra.mxu0 0.0
        %471 = vmatprep.subr.mxu0 0.0
        %472 = vmatpush1.msra.mxu0 0.0
        %473 = vmatprep.subr.mxu0 0.0
        %474 = vmatpush1.msra.mxu0 0.0
        %475 = vmatprep.subr.mxu0 0.0
        %476 = vmatpush1.msra.mxu0 0.0
        %477 = vmatprep.subr.mxu0 0.0
        %478 = vmatpush1.msra.mxu0 0.0
        %479 = vmatprep.subr.mxu0 0.0
        %480 = vmatpush1.msra.mxu0 0.0
        %481 = vmatprep.subr.mxu0 0.0
        %482 = vmatpush1.msra.mxu0 0.0
        %483 = vmatprep.subr.mxu0 0.0
        %484 = vmatpush1.msra.mxu0 0.0
        %485 = vmatprep.subr.mxu0 0.0
        %486 = vmatpush1.msra.mxu0 0.0
        %487 = vmatprep.subr.mxu0 0.0
        %488 = vmatpush1.msra.mxu0 0.0
        %489 = vmatprep.subr.mxu0 0.0
        %490 = vmatpush1.msra.mxu0 0.0
        %491 = vmatprep.subr.mxu0 0.0
        %492 = vmatpush1.msra.mxu0 0.0
        %493 = vmatprep.subr.mxu0 0.0
        %494 = vmatpush1.msra.mxu0 0.0
        %495 = vmatprep.subr.mxu0 0.0
        %496 = vmatpush1.msra.mxu0 0.0
        %497 = vmatprep.subr.mxu0 0.0
        %498 = vmatpush1.msra.mxu0 0.0
        %499 = vmatprep.subr.mxu0 0.0
        %500 = vmatpush1.msra.mxu0 0.0
        %501 = vmatprep.subr.mxu0 0.0
        %502 = vmatpush1.msra.mxu0 0.0
        %503 = vmatprep.subr.mxu0 0.0
        %504 = vmatpush1.msra.mxu0 0.0
        %505 = vmatprep.subr.mxu0 0.0
        %506 = vmatpush1.msra.mxu0 0.0
        %507 = vmatprep.subr.mxu0 0.0
        %508 = vmatpush1.msra.mxu0 0.0
        %509 = vmatprep.subr.mxu0 0.0
        %510 = vmatpush1.msra.mxu0 0.0
        %511 = vmatprep.subr.mxu0 0.0
        %512 = vmatpush1.msra.mxu0 0.0
        %513 = vmatprep.subr.mxu0 0.0
        %514 = vmatpush1.msra.mxu0 0.0
        %515 = vmatprep.subr.mxu0 0.0
        %516 = vmatpush1.msra.mxu0 0.0
        %517 = vmatprep.subr.mxu0 0.0
        %518 = vmatpush1.msra.mxu0 0.0
        %519 = vmatprep.subr.mxu0 0.0
        %520 = vmatpush1.msra.mxu0 0.0
        %521 = vmatprep.subr.mxu0 0.0
        %522 = vmatpush1.msra.mxu0 0.0
        %523 = vmatprep.subr.mxu0 0.0
        %524 = vmatpush1.msra.mxu0 0.0
        %525 = vmatprep.mubr.f32.mxu0 0.0
        %526 = vmatmul.mubr.f32.gmra.mrb[0].mxu0 %v455
        %v527 = vpop.f32.mrb[0].mxu0
        %v528 = vadd.f32 0.0, %v527
        %v529 = vpop.f32.mrb[0].mxu0
        %v530 = vadd.f32 0.0, %v529
        %531 = vdwg.mxu0
        %v533 = vsel %vm353, %v447, 0
        %v535 = vsel %vm357, %v445, 0
        %v537 = vsel %vm357, %v446, 0
        %539 = vmatprep.subr.mxu0 %v537
        %540 = vmatpush1.msra.mxu0 %v535
        %541 = vmatprep.subr.mxu0 0.0
        %542 = vmatpush1.msra.mxu0 0.0
        %543 = vmatprep.subr.mxu0 0.0
        %544 = vmatpush1.msra.mxu0 0.0
        %545 = vmatprep.subr.mxu0 0.0
        %546 = vmatpush1.msra.mxu0 0.0
        %547 = vmatprep.subr.mxu0 0.0
        %548 = vmatpush1.msra.mxu0 0.0
        %549 = vmatprep.subr.mxu0 0.0
        %550 = vmatpush1.msra.mxu0 0.0
        %551 = vmatprep.subr.mxu0 0.0
        %552 = vmatpush1.msra.mxu0 0.0
        %553 = vmatprep.subr.mxu0 0.0
        %554 = vmatpush1.msra.mxu0 0.0
        %555 = vmatprep.subr.mxu0 0.0
        %556 = vmatpush1.msra.mxu0 0.0
        %557 = vmatprep.subr.mxu0 0.0
        %558 = vmatpush1.msra.mxu0 0.0
        %559 = vmatprep.subr.mxu0 0.0
        %560 = vmatpush1.msra.mxu0 0.0
        %561 = vmatprep.subr.mxu0 0.0
        %562 = vmatpush1.msra.mxu0 0.0
        %563 = vmatprep.subr.mxu0 0.0
        %564 = vmatpush1.msra.mxu0 0.0
        %565 = vmatprep.subr.mxu0 0.0
        %566 = vmatpush1.msra.mxu0 0.0
        %567 = vmatprep.subr.mxu0 0.0
        %568 = vmatpush1.msra.mxu0 0.0
        %569 = vmatprep.subr.mxu0 0.0
        %570 = vmatpush1.msra.mxu0 0.0
        %571 = vmatprep.subr.mxu0 0.0
        %572 = vmatpush1.msra.mxu0 0.0
        %573 = vmatprep.subr.mxu0 0.0
        %574 = vmatpush1.msra.mxu0 0.0
        %575 = vmatprep.subr.mxu0 0.0
        %576 = vmatpush1.msra.mxu0 0.0
        %577 = vmatprep.subr.mxu0 0.0
        %578 = vmatpush1.msra.mxu0 0.0
        %579 = vmatprep.subr.mxu0 0.0
        %580 = vmatpush1.msra.mxu0 0.0
        %581 = vmatprep.subr.mxu0 0.0
        %582 = vmatpush1.msra.mxu0 0.0
        %583 = vmatprep.subr.mxu0 0.0
        %584 = vmatpush1.msra.mxu0 0.0
        %585 = vmatprep.subr.mxu0 0.0
        %586 = vmatpush1.msra.mxu0 0.0
        %587 = vmatprep.subr.mxu0 0.0
        %588 = vmatpush1.msra.mxu0 0.0
        %589 = vmatprep.subr.mxu0 0.0
        %590 = vmatpush1.msra.mxu0 0.0
        %591 = vmatprep.subr.mxu0 0.0
        %592 = vmatpush1.msra.mxu0 0.0
        %593 = vmatprep.subr.mxu0 0.0
        %594 = vmatpush1.msra.mxu0 0.0
        %595 = vmatprep.subr.mxu0 0.0
        %596 = vmatpush1.msra.mxu0 0.0
        %597 = vmatprep.subr.mxu0 0.0
        %598 = vmatpush1.msra.mxu0 0.0
        %599 = vmatprep.subr.mxu0 0.0
        %600 = vmatpush1.msra.mxu0 0.0
        %601 = vmatprep.subr.mxu0 0.0
        %602 = vmatpush1.msra.mxu0 0.0
        %603 = vmatprep.mubr.f32.mxu0 0.0
        %604 = vmatmul.mubr.f32.gmra.mrb[0].mxu0 %v533
        %v605 = vpop.f32.mrb[0].mxu0
        %v606 = vadd.f32 %v528, %v605
        %v607 = vpop.f32.mrb[0].mxu0
        %v608 = vadd.f32 %v530, %v607
        %609 = vdwg.mxu0
        %v611 = vlaneseq
        %v612 = vshrl.u32 %v611, 7
        %v613 = vsub.s32 0, %v612
        %v614 = vrot.slane %v341, %v613
        %v615 = vlaneseq
        %v616 = vshrl.u32 %v615, 7
        %v617 = vsub.s32 1, %v616
        %v618 = vrot.slane %v341, %v617
        %v621 = vmul.f32 %v445, %v614
        %v622 = vmul.f32 %v446, %v618
        %v624 = vlaneseq
        %v625 = vshrl.u32 %v624, 7
        %v626 = vsub.s32 0, %v625
        %v627 = vrot.slane %v343, %v626
        %v628 = vlaneseq
        %v629 = vshrl.u32 %v628, 7
        %v630 = vsub.s32 1, %v629
        %v631 = vrot.slane %v343, %v630
        %v634 = vmul.f32 %v445, %v627
        %v635 = vmul.f32 %v446, %v631
        %v638 = vrot.slane %v621, 4
        %v639 = vrot.slane %v622, 4
        %640 = vrot.lane.b32.xlu0 %v638, 17
        %v641 = vpop.permute.xlu0 %640
        %642 = vrot.lane.b32.xlu0 %v639, 17
        %v643 = vpop.permute.xlu0 %642
        %vm644 = vcmask 138240
        %v645 = vsel %vm644, %v641, %v643
        %vm649 = vcmask 1043592
        %650 = vst.msk [vmem:[#allocation2 + $0x8] sm:$0xf] %vm649, %v641
        %651 = vst [vmem:[#allocation2 + $0x10] sm:$0xf] %v645
        %vm652 = vcmask 134144
        %653 = vst.msk [vmem:[#allocation2 + $0x18] sm:$0xf] %vm652, %v643
        %654 = vrot.lane.b32.xlu0 %v452, 16
        %v655 = vpop.permute.xlu0 %654
        %656 = vrot.lane.b32.xlu0 %v453, 16
        %v657 = vpop.permute.xlu0 %656
        %vm658 = vcmask 130048
        %v659 = vsel %vm658, %v655, %v657
        %vm663 = vcmask 1043584
        %664 = vst.msk [vmem:[#allocation2 + $0x28] sm:$0xf] %vm663, %v655
        %665 = vst [vmem:[#allocation2 + $0x30] sm:$0xf] %v659
        %vm666 = vcmask 125952
        %667 = vst.msk [vmem:[#allocation2 + $0x38] sm:$0xf] %vm666, %v657
        %v670 = vrot.slane %v634, 4
        %v671 = vrot.slane %v635, 4
        %672 = vrot.lane.b32.xlu0 %v670, 15
        %v673 = vpop.permute.xlu0 %672
        %674 = vrot.lane.b32.xlu0 %v671, 15
        %v675 = vpop.permute.xlu0 %674
        %vm676 = vcmask 121856
        %v677 = vsel %vm676, %v673, %v675
        %vm681 = vcmask 1043576
        %682 = vst.msk [vmem:[#allocation2 + $0x48] sm:$0xf] %vm681, %v673
        %683 = vst [vmem:[#allocation2 + $0x50] sm:$0xf] %v677
        %vm684 = vcmask 117760
        %685 = vst.msk [vmem:[#allocation2 + $0x58] sm:$0xf] %vm684, %v675
        %686 = vrot.lane.b32.xlu0 %v638, 1
        %v687 = vpop.permute.xlu0 %686
        %688 = vrot.lane.b32.xlu0 %v639, 1
        %v689 = vpop.permute.xlu0 %688
        %vm690 = vcmask 7168
        %v691 = vsel %vm690, %v687, %v689
        %vm695 = vcmask 1043464
        %696 = vst.msk [vmem:[#allocation2 + $0x68] sm:$0xf] %vm695, %v687
        %697 = vst [vmem:[#allocation2 + $0x70] sm:$0xf] %v691
        %vm698 = vcmask 3072
        %699 = vst.msk [vmem:[#allocation2 + $0x78] sm:$0xf] %vm698, %v689
        %702 = vst [vmem:[#allocation2 + $0x88] sm:$0xf] %v452
        %703 = vst [vmem:[#allocation2 + $0x90] sm:$0xf] %v453
        %704 = vrot.lane.b32.xlu0 %v670, 127
        %v705 = vpop.permute.xlu0 %704
        %706 = vrot.lane.b32.xlu0 %v671, 127
        %v707 = vpop.permute.xlu0 %706
        %vm708 = vcmask 1039360
        %v709 = vsel %vm708, %v705, %v707
        %vm713 = vcmask 1044472
        %714 = vst.msk [vmem:[#allocation2 + $0xa0] sm:$0xf] %vm713, %v705
        %715 = vst [vmem:[#allocation2 + $0xa8] sm:$0xf] %v709
        %vm716 = vcmask 1035264
        %717 = vst.msk [vmem:[#allocation2 + $0xb0] sm:$0xf] %vm716, %v707
        %718 = vrot.lane.b32.xlu0 %v638, 113
        %v719 = vpop.permute.xlu0 %718
        %720 = vrot.lane.b32.xlu0 %v639, 113
        %v721 = vpop.permute.xlu0 %720
        %vm722 = vcmask 924672
        %v723 = vsel %vm722, %v719, %v721
        %vm727 = vcmask 1044360
        %728 = vst.msk [vmem:[#allocation2 + $0xc0] sm:$0xf] %vm727, %v719
        %729 = vst [vmem:[#allocation2 + $0xc8] sm:$0xf] %v723
        %vm730 = vcmask 920576
        %731 = vst.msk [vmem:[#allocation2 + $0xd0] sm:$0xf] %vm730, %v721
        %732 = vrot.lane.b32.xlu0 %v452, 112
        %v733 = vpop.permute.xlu0 %732
        %734 = vrot.lane.b32.xlu0 %v453, 112
        %v735 = vpop.permute.xlu0 %734
        %vm736 = vcmask 916480
        %v737 = vsel %vm736, %v733, %v735
        %vm741 = vcmask 1044352
        %742 = vst.msk [vmem:[#allocation2 + $0xe0] sm:$0xf] %vm741, %v733
        %743 = vst [vmem:[#allocation2 + $0xe8] sm:$0xf] %v737
        %vm744 = vcmask 912384
        %745 = vst.msk [vmem:[#allocation2 + $0xf0] sm:$0xf] %vm744, %v735
        %746 = vrot.lane.b32.xlu0 %v670, 111
        %v747 = vpop.permute.xlu0 %746
        %748 = vrot.lane.b32.xlu0 %v671, 111
        %v749 = vpop.permute.xlu0 %748
        %vm750 = vcmask 908288
        %v751 = vsel %vm750, %v747, %v749
        %vm755 = vcmask 1044344
        %756 = vst.msk [vmem:[#allocation2 + $0x100] sm:$0xf] %vm755, %v747
        %757 = vst [vmem:[#allocation2 + $0x108] sm:$0xf] %v751
        %vm758 = vcmask 904192
        %759 = vst.msk [vmem:[#allocation2 + $0x110] sm:$0xf] %vm758, %v749
        %v760 = vld [vmem:[#allocation2 + $0x8] sm:$0xff]
        %v761 = vld [vmem:[#allocation2 + $0x10] sm:$0xff]
        %v762 = vld [vmem:[#allocation2 + $0x28] sm:$0xff]
        %v763 = vld [vmem:[#allocation2 + $0x30] sm:$0xff]
        %v764 = vld [vmem:[#allocation2 + $0x48] sm:$0xff]
        %v765 = vld [vmem:[#allocation2 + $0x50] sm:$0xff]
        %v766 = vld [vmem:[#allocation2 + $0x68] sm:$0xff]
        %v767 = vld [vmem:[#allocation2 + $0x70] sm:$0xff]
        %v768 = vld [vmem:[#allocation2 + $0x88] sm:$0xff]
        %v769 = vld [vmem:[#allocation2 + $0x90] sm:$0xff]
        %v770 = vld [vmem:[#allocation2 + $0xa8] sm:$0xff]
        %v771 = vld [vmem:[#allocation2 + $0xb0] sm:$0xff]
        %v772 = vld [vmem:[#allocation2 + $0xc8] sm:$0xff]
        %v773 = vld [vmem:[#allocation2 + $0xd0] sm:$0xff]
        %v774 = vld [vmem:[#allocation2 + $0xe8] sm:$0xff]
        %v775 = vld [vmem:[#allocation2 + $0xf0] sm:$0xff]
        %v776 = vld [vmem:[#allocation2 + $0x108] sm:$0xff]
        %v777 = vld [vmem:[#allocation2 + $0x110] sm:$0xff]
        %v778 = vld [vmem:[%s4] sm:$0xf]
        %v779 = vld [vmem:[%s5] sm:$0xf]
        %781 = vset.pattern.permute.xlu0 0
        %782 = vperm.xlu0 %781, %v779
        %v783 = vpop.permute.xlu0 %782
        %vm785 = vcmask 588800
        %v787 = vsel %vm785, %v778, 0
        %789 = vmatprep.subr.mxu0 %v761
        %790 = vmatpush1.msra.mxu0 %v760
        %791 = vmatprep.subr.mxu0 %v763
        %792 = vmatpush1.msra.mxu0 %v762
        %793 = vmatprep.subr.mxu0 %v765
        %794 = vmatpush1.msra.mxu0 %v764
        %795 = vmatprep.subr.mxu0 %v767
        %796 = vmatpush1.msra.mxu0 %v766
        %797 = vmatprep.subr.mxu0 %v769
        %798 = vmatpush1.msra.mxu0 %v768
        %799 = vmatprep.subr.mxu0 %v771
        %800 = vmatpush1.msra.mxu0 %v770
        %801 = vmatprep.subr.mxu0 %v773
        %802 = vmatpush1.msra.mxu0 %v772
        %803 = vmatprep.subr.mxu0 %v775
        %804 = vmatpush1.msra.mxu0 %v774
        %805 = vmatprep.subr.mxu0 %v777
        %806 = vmatpush1.msra.mxu0 %v776
        %807 = vmatprep.subr.mxu0 0.0
        %808 = vmatpush1.msra.mxu0 0.0
        %809 = vmatprep.subr.mxu0 0.0
        %810 = vmatpush1.msra.mxu0 0.0
        %811 = vmatprep.subr.mxu0 0.0
        %812 = vmatpush1.msra.mxu0 0.0
        %813 = vmatprep.subr.mxu0 0.0
        %814 = vmatpush1.msra.mxu0 0.0
        %815 = vmatprep.subr.mxu0 0.0
        %816 = vmatpush1.msra.mxu0 0.0
        %817 = vmatprep.subr.mxu0 0.0
        %818 = vmatpush1.msra.mxu0 0.0
        %819 = vmatprep.subr.mxu0 0.0
        %820 = vmatpush1.msra.mxu0 0.0
        %821 = vmatprep.subr.mxu0 0.0
        %822 = vmatpush1.msra.mxu0 0.0
        %823 = vmatprep.subr.mxu0 0.0
        %824 = vmatpush1.msra.mxu0 0.0
        %825 = vmatprep.subr.mxu0 0.0
        %826 = vmatpush1.msra.mxu0 0.0
        %827 = vmatprep.subr.mxu0 0.0
        %828 = vmatpush1.msra.mxu0 0.0
        %829 = vmatprep.subr.mxu0 0.0
        %830 = vmatpush1.msra.mxu0 0.0
        %831 = vmatprep.subr.mxu0 0.0
        %832 = vmatpush1.msra.mxu0 0.0
        %833 = vmatprep.subr.mxu0 0.0
        %834 = vmatpush1.msra.mxu0 0.0
        %835 = vmatprep.subr.mxu0 0.0
        %836 = vmatpush1.msra.mxu0 0.0
        %837 = vmatprep.subr.mxu0 0.0
        %838 = vmatpush1.msra.mxu0 0.0
        %839 = vmatprep.subr.mxu0 0.0
        %840 = vmatpush1.msra.mxu0 0.0
        %841 = vmatprep.subr.mxu0 0.0
        %842 = vmatpush1.msra.mxu0 0.0
        %843 = vmatprep.subr.mxu0 0.0
        %844 = vmatpush1.msra.mxu0 0.0
        %845 = vmatprep.subr.mxu0 0.0
        %846 = vmatpush1.msra.mxu0 0.0
        %847 = vmatprep.subr.mxu0 0.0
        %848 = vmatpush1.msra.mxu0 0.0
        %849 = vmatprep.subr.mxu0 0.0
        %850 = vmatpush1.msra.mxu0 0.0
        %851 = vmatprep.subr.mxu0 0.0
        %852 = vmatpush1.msra.mxu0 0.0
        %853 = vmatprep.mubr.f32.mxu0 0.0
        %854 = vmatmul.mubr.f32.gmra.mrb[0].mxu0 %v787
        %v855 = vpop.f32.mrb[0].mxu0
        %v856 = vadd.f32 %v783, %v855
        %v857 = vpop.f32.mrb[0].mxu0
        %v858 = vadd.f32 %v783, %v857
        %859 = vdwg.mxu0
        %v860 = vxor.u32 %v856, 2147483648
        %v861 = vxor.u32 %v858, 2147483648
        %v862 = vmul.f32 %v860, 1.442695
        %v863 = vpow.pop %v862
        %v864 = vmul.f32 %v861, 1.442695
        %v865 = vpow.pop %v864
        %v866 = vadd.f32 %v863, 1.0
        %v867 = vadd.f32 %v865, 1.0
        %v868 = vrcp.pop %v866
        %v869 = vmul.f32 1.0, %v868
        %v870 = vrcp.pop %v867
        %v871 = vmul.f32 1.0, %v870
        %v872 = vmul.f32 %v856, %v869
        %v873 = vmul.f32 %v858, %v871
        %v874 = vmul.f32 %v872, %v614
        %v875 = vmul.f32 %v873, %v618
        %v876 = vmul.f32 %v872, %v627
        %v877 = vmul.f32 %v873, %v631
        %880 = vrot.lane.b32.xlu0 %v874, 17
        %v881 = vpop.permute.xlu0 %880
        %882 = vrot.lane.b32.xlu0 %v875, 17
        %v883 = vpop.permute.xlu0 %882
        %v884 = vsel %vm644, %v881, %v883
        %888 = vst.msk [vmem:[#allocation2 + $0x8] sm:$0xf] %vm649, %v881
        %889 = vst [vmem:[#allocation2 + $0x10] sm:$0xf] %v884
        %890 = vst.msk [vmem:[#allocation2 + $0x18] sm:$0xf] %vm652, %v883
        %893 = vrot.lane.b32.xlu0 %v872, 16
        %v894 = vpop.permute.xlu0 %893
        %895 = vrot.lane.b32.xlu0 %v873, 16
        %v896 = vpop.permute.xlu0 %895
        %v897 = vsel %vm658, %v894, %v896
        %901 = vst.msk [vmem:[#allocation2 + $0x28] sm:$0xf] %vm663, %v894
        %902 = vst [vmem:[#allocation2 + $0x30] sm:$0xf] %v897
        %903 = vst.msk [vmem:[#allocation2 + $0x38] sm:$0xf] %vm666, %v896
        %906 = vrot.lane.b32.xlu0 %v876, 15
        %v907 = vpop.permute.xlu0 %906
        %908 = vrot.lane.b32.xlu0 %v877, 15
        %v909 = vpop.permute.xlu0 %908
        %v910 = vsel %vm676, %v907, %v909
        %914 = vst.msk [vmem:[#allocation2 + $0x48] sm:$0xf] %vm681, %v907
        %915 = vst [vmem:[#allocation2 + $0x50] sm:$0xf] %v910
        %916 = vst.msk [vmem:[#allocation2 + $0x58] sm:$0xf] %vm684, %v909
        %917 = vrot.lane.b32.xlu0 %v874, 1
        %v918 = vpop.permute.xlu0 %917
        %919 = vrot.lane.b32.xlu0 %v875, 1
        %v920 = vpop.permute.xlu0 %919
        %v921 = vsel %vm690, %v918, %v920
        %925 = vst.msk [vmem:[#allocation2 + $0x68] sm:$0xf] %vm695, %v918
        %926 = vst [vmem:[#allocation2 + $0x70] sm:$0xf] %v921
        %927 = vst.msk [vmem:[#allocation2 + $0x78] sm:$0xf] %vm698, %v920
        %928 = vst [vmem:[#allocation2 + $0x88] sm:$0xf] %v872
        %929 = vst [vmem:[#allocation2 + $0x90] sm:$0xf] %v873
        %930 = vrot.lane.b32.xlu0 %v876, 127
        %v931 = vpop.permute.xlu0 %930
        %932 = vrot.lane.b32.xlu0 %v877, 127
        %v933 = vpop.permute.xlu0 %932
        %v934 = vsel %vm708, %v931, %v933
        %938 = vst.msk [vmem:[#allocation2 + $0xa0] sm:$0xf] %vm713, %v931
        %939 = vst [vmem:[#allocation2 + $0xa8] sm:$0xf] %v934
        %940 = vst.msk [vmem:[#allocation2 + $0xb0] sm:$0xf] %vm716, %v933
        %941 = vrot.lane.b32.xlu0 %v874, 113
        %v942 = vpop.permute.xlu0 %941
        %943 = vrot.lane.b32.xlu0 %v875, 113
        %v944 = vpop.permute.xlu0 %943
        %v945 = vsel %vm722, %v942, %v944
        %949 = vst.msk [vmem:[#allocation2 + $0xc0] sm:$0xf] %vm727, %v942
        %950 = vst [vmem:[#allocation2 + $0xc8] sm:$0xf] %v945
        %951 = vst.msk [vmem:[#allocation2 + $0xd0] sm:$0xf] %vm730, %v944
        %952 = vrot.lane.b32.xlu0 %v872, 112
        %v953 = vpop.permute.xlu0 %952
        %954 = vrot.lane.b32.xlu0 %v873, 112
        %v955 = vpop.permute.xlu0 %954
        %v956 = vsel %vm736, %v953, %v955
        %960 = vst.msk [vmem:[#allocation2 + $0xe0] sm:$0xf] %vm741, %v953
        %961 = vst [vmem:[#allocation2 + $0xe8] sm:$0xf] %v956
        %962 = vst.msk [vmem:[#allocation2 + $0xf0] sm:$0xf] %vm744, %v955
        %963 = vrot.lane.b32.xlu0 %v876, 111
        %v964 = vpop.permute.xlu0 %963
        %965 = vrot.lane.b32.xlu0 %v877, 111
        %v966 = vpop.permute.xlu0 %965
        %v967 = vsel %vm750, %v964, %v966
        %971 = vst.msk [vmem:[#allocation2 + $0x100] sm:$0xf] %vm755, %v964
        %972 = vst [vmem:[#allocation2 + $0x108] sm:$0xf] %v967
        %973 = vst.msk [vmem:[#allocation2 + $0x110] sm:$0xf] %vm758, %v966
        %v974 = vld [vmem:[#allocation2 + $0x8] sm:$0xff]
        %v975 = vld [vmem:[#allocation2 + $0x10] sm:$0xff]
        %v976 = vld [vmem:[#allocation2 + $0x28] sm:$0xff]
        %v977 = vld [vmem:[#allocation2 + $0x30] sm:$0xff]
        %v978 = vld [vmem:[#allocation2 + $0x48] sm:$0xff]
        %v979 = vld [vmem:[#allocation2 + $0x50] sm:$0xff]
        %v980 = vld [vmem:[#allocation2 + $0x68] sm:$0xff]
        %v981 = vld [vmem:[#allocation2 + $0x70] sm:$0xff]
        %v982 = vld [vmem:[#allocation2 + $0x88] sm:$0xff]
        %v983 = vld [vmem:[#allocation2 + $0x90] sm:$0xff]
        %v984 = vld [vmem:[#allocation2 + $0xa8] sm:$0xff]
        %v985 = vld [vmem:[#allocation2 + $0xb0] sm:$0xff]
        %v986 = vld [vmem:[#allocation2 + $0xc8] sm:$0xff]
        %v987 = vld [vmem:[#allocation2 + $0xd0] sm:$0xff]
        %v988 = vld [vmem:[#allocation2 + $0xe8] sm:$0xff]
        %v989 = vld [vmem:[#allocation2 + $0xf0] sm:$0xff]
        %v990 = vld [vmem:[#allocation2 + $0x108] sm:$0xff]
        %v991 = vld [vmem:[#allocation2 + $0x110] sm:$0xff]
        %s992 = scalar_lea.vmem %s4, 4
        %v993 = vld [vmem:[%s992] sm:$0xf]
        %s994 = scalar_lea.vmem %s5, 4
        %v995 = vld [vmem:[%s994] sm:$0xf]
        %997 = vset.pattern.permute.xlu0 0
        %998 = vperm.xlu0 %997, %v995
        %v999 = vpop.permute.xlu0 %998
        %v1002 = vsel %vm785, %v993, 0
        %1004 = vmatprep.subr.mxu0 %v975
        %1005 = vmatpush1.msra.mxu0 %v974
        %1006 = vmatprep.subr.mxu0 %v977
        %1007 = vmatpush1.msra.mxu0 %v976
        %1008 = vmatprep.subr.mxu0 %v979
        %1009 = vmatpush1.msra.mxu0 %v978
        %1010 = vmatprep.subr.mxu0 %v981
        %1011 = vmatpush1.msra.mxu0 %v980
        %1012 = vmatprep.subr.mxu0 %v983
        %1013 = vmatpush1.msra.mxu0 %v982
        %1014 = vmatprep.subr.mxu0 %v985
        %1015 = vmatpush1.msra.mxu0 %v984
        %1016 = vmatprep.subr.mxu0 %v987
        %1017 = vmatpush1.msra.mxu0 %v986
        %1018 = vmatprep.subr.mxu0 %v989
        %1019 = vmatpush1.msra.mxu0 %v988
        %1020 = vmatprep.subr.mxu0 %v991
        %1021 = vmatpush1.msra.mxu0 %v990
        %1022 = vmatprep.subr.mxu0 0.0
        %1023 = vmatpush1.msra.mxu0 0.0
        %1024 = vmatprep.subr.mxu0 0.0
        %1025 = vmatpush1.msra.mxu0 0.0
        %1026 = vmatprep.subr.mxu0 0.0
        %1027 = vmatpush1.msra.mxu0 0.0
        %1028 = vmatprep.subr.mxu0 0.0
        %1029 = vmatpush1.msra.mxu0 0.0
        %1030 = vmatprep.subr.mxu0 0.0
        %1031 = vmatpush1.msra.mxu0 0.0
        %1032 = vmatprep.subr.mxu0 0.0
        %1033 = vmatpush1.msra.mxu0 0.0
        %1034 = vmatprep.subr.mxu0 0.0
        %1035 = vmatpush1.msra.mxu0 0.0
        %1036 = vmatprep.subr.mxu0 0.0
        %1037 = vmatpush1.msra.mxu0 0.0
        %1038 = vmatprep.subr.mxu0 0.0
        %1039 = vmatpush1.msra.mxu0 0.0
        %1040 = vmatprep.subr.mxu0 0.0
        %1041 = vmatpush1.msra.mxu0 0.0
        %1042 = vmatprep.subr.mxu0 0.0
        %1043 = vmatpush1.msra.mxu0 0.0
        %1044 = vmatprep.subr.mxu0 0.0
        %1045 = vmatpush1.msra.mxu0 0.0
        %1046 = vmatprep.subr.mxu0 0.0
        %1047 = vmatpush1.msra.mxu0 0.0
        %1048 = vmatprep.subr.mxu0 0.0
        %1049 = vmatpush1.msra.mxu0 0.0
        %1050 = vmatprep.subr.mxu0 0.0
        %1051 = vmatpush1.msra.mxu0 0.0
        %1052 = vmatprep.subr.mxu0 0.0
        %1053 = vmatpush1.msra.mxu0 0.0
        %1054 = vmatprep.subr.mxu0 0.0
        %1055 = vmatpush1.msra.mxu0 0.0
        %1056 = vmatprep.subr.mxu0 0.0
        %1057 = vmatpush1.msra.mxu0 0.0
        %1058 = vmatprep.subr.mxu0 0.0
        %1059 = vmatpush1.msra.mxu0 0.0
        %1060 = vmatprep.subr.mxu0 0.0
        %1061 = vmatpush1.msra.mxu0 0.0
        %1062 = vmatprep.subr.mxu0 0.0
        %1063 = vmatpush1.msra.mxu0 0.0
        %1064 = vmatprep.subr.mxu0 0.0
        %1065 = vmatpush1.msra.mxu0 0.0
        %1066 = vmatprep.subr.mxu0 0.0
        %1067 = vmatpush1.msra.mxu0 0.0
        %1068 = vmatprep.mubr.f32.mxu0 0.0
        %1069 = vmatmul.mubr.f32.gmra.mrb[0].mxu0 %v1002
        %v1070 = vpop.f32.mrb[0].mxu0
        %v1071 = vadd.f32 %v999, %v1070
        %v1072 = vpop.f32.mrb[0].mxu0
        %v1073 = vadd.f32 %v999, %v1072
        %1074 = vdwg.mxu0
        %v1075 = vxor.u32 %v1071, 2147483648
        %v1076 = vxor.u32 %v1073, 2147483648
        %v1077 = vmul.f32 %v1075, 1.442695
        %v1078 = vpow.pop %v1077
        %v1079 = vmul.f32 %v1076, 1.442695
        %v1080 = vpow.pop %v1079
        %v1081 = vadd.f32 %v1078, 1.0
        %v1082 = vadd.f32 %v1080, 1.0
        %v1083 = vrcp.pop %v1081
        %v1084 = vmul.f32 1.0, %v1083
        %v1085 = vrcp.pop %v1082
        %v1086 = vmul.f32 1.0, %v1085
        %v1087 = vmul.f32 %v1071, %v1084
        %v1088 = vmul.f32 %v1073, %v1086
        %v1089 = vadd.f32 %v1087, %v452
        %v1090 = vadd.f32 %v1088, %v453
        %s1091 = scalar_lea.vmem %s6, 16
        %v1092 = vld [vmem:[%s1091] sm:$0xff]
        %v1094 = vsel %vm353, %v1092, 0
        %v1097 = vsel %vm357, %v1089, 0
        %v1100 = vsel %vm357, %v1090, 0
        %1102 = vmatprep.subr.mxu0 %v1100
        %1103 = vmatpush1.msra.mxu0 %v1097
        %1104 = vmatprep.subr.mxu0 0.0
        %1105 = vmatpush1.msra.mxu0 0.0
        %1106 = vmatprep.subr.mxu0 0.0
        %1107 = vmatpush1.msra.mxu0 0.0
        %1108 = vmatprep.subr.mxu0 0.0
        %1109 = vmatpush1.msra.mxu0 0.0
        %1110 = vmatprep.subr.mxu0 0.0
        %1111 = vmatpush1.msra.mxu0 0.0
        %1112 = vmatprep.subr.mxu0 0.0
        %1113 = vmatpush1.msra.mxu0 0.0
        %1114 = vmatprep.subr.mxu0 0.0
        %1115 = vmatpush1.msra.mxu0 0.0
        %1116 = vmatprep.subr.mxu0 0.0
        %1117 = vmatpush1.msra.mxu0 0.0
        %1118 = vmatprep.subr.mxu0 0.0
        %1119 = vmatpush1.msra.mxu0 0.0
        %1120 = vmatprep.subr.mxu0 0.0
        %1121 = vmatpush1.msra.mxu0 0.0
        %1122 = vmatprep.subr.mxu0 0.0
        %1123 = vmatpush1.msra.mxu0 0.0
        %1124 = vmatprep.subr.mxu0 0.0
        %1125 = vmatpush1.msra.mxu0 0.0
        %1126 = vmatprep.subr.mxu0 0.0
        %1127 = vmatpush1.msra.mxu0 0.0
        %1128 = vmatprep.subr.mxu0 0.0
        %1129 = vmatpush1.msra.mxu0 0.0
        %1130 = vmatprep.subr.mxu0 0.0
        %1131 = vmatpush1.msra.mxu0 0.0
        %1132 = vmatprep.subr.mxu0 0.0
        %1133 = vmatpush1.msra.mxu0 0.0
        %1134 = vmatprep.subr.mxu0 0.0
        %1135 = vmatpush1.msra.mxu0 0.0
        %1136 = vmatprep.subr.mxu0 0.0
        %1137 = vmatpush1.msra.mxu0 0.0
        %1138 = vmatprep.subr.mxu0 0.0
        %1139 = vmatpush1.msra.mxu0 0.0
        %1140 = vmatprep.subr.mxu0 0.0
        %1141 = vmatpush1.msra.mxu0 0.0
        %1142 = vmatprep.subr.mxu0 0.0
        %1143 = vmatpush1.msra.mxu0 0.0
        %1144 = vmatprep.subr.mxu0 0.0
        %1145 = vmatpush1.msra.mxu0 0.0
        %1146 = vmatprep.subr.mxu0 0.0
        %1147 = vmatpush1.msra.mxu0 0.0
        %1148 = vmatprep.subr.mxu0 0.0
        %1149 = vmatpush1.msra.mxu0 0.0
        %1150 = vmatprep.subr.mxu0 0.0
        %1151 = vmatpush1.msra.mxu0 0.0
        %1152 = vmatprep.subr.mxu0 0.0
        %1153 = vmatpush1.msra.mxu0 0.0
        %1154 = vmatprep.subr.mxu0 0.0
        %1155 = vmatpush1.msra.mxu0 0.0
        %1156 = vmatprep.subr.mxu0 0.0
        %1157 = vmatpush1.msra.mxu0 0.0
        %1158 = vmatprep.subr.mxu0 0.0
        %1159 = vmatpush1.msra.mxu0 0.0
        %1160 = vmatprep.subr.mxu0 0.0
        %1161 = vmatpush1.msra.mxu0 0.0
        %1162 = vmatprep.subr.mxu0 0.0
        %1163 = vmatpush1.msra.mxu0 0.0
        %1164 = vmatprep.subr.mxu0 0.0
        %1165 = vmatpush1.msra.mxu0 0.0
        %1166 = vmatprep.mubr.f32.mxu0 0.0
        %1167 = vmatmul.mubr.f32.gmra.mrb[0].mxu0 %v1094
        %v1168 = vpop.f32.mrb[0].mxu0
        %v1169 = vadd.f32 0.0, %v1168
        %v1170 = vpop.f32.mrb[0].mxu0
        %v1171 = vadd.f32 0.0, %v1170
        %1172 = vdwg.mxu0
        %v1173 = vadd.f32 %v606, %v1169
        %v1174 = vadd.f32 %v608, %v1171
        %v1175 = vmul.f32 %v1089, %v614
        %v1176 = vmul.f32 %v1090, %v618
        %v1177 = vmul.f32 %v1089, %v627
        %v1178 = vmul.f32 %v1090, %v631
        %1181 = vrot.lane.b32.xlu0 %v1175, 17
        %v1182 = vpop.permute.xlu0 %1181
        %1183 = vrot.lane.b32.xlu0 %v1176, 17
        %v1184 = vpop.permute.xlu0 %1183
        %v1185 = vsel %vm644, %v1182, %v1184
        %1189 = vst.msk [vmem:[#allocation2 + $0x8] sm:$0xf] %vm649, %v1182
        %1190 = vst [vmem:[#allocation2 + $0x10] sm:$0xf] %v1185
        %1191 = vst.msk [vmem:[#allocation2 + $0x18] sm:$0xf] %vm652, %v1184
        %1192 = vrot.lane.b32.xlu0 %v1089, 16
        %v1193 = vpop.permute.xlu0 %1192
        %1194 = vrot.lane.b32.xlu0 %v1090, 16
        %v1195 = vpop.permute.xlu0 %1194
        %v1196 = vsel %vm658, %v1193, %v1195
        %1200 = vst.msk [vmem:[#allocation2 + $0x28] sm:$0xf] %vm663, %v1193
        %1201 = vst [vmem:[#allocation2 + $0x30] sm:$0xf] %v1196
        %1202 = vst.msk [vmem:[#allocation2 + $0x38] sm:$0xf] %vm666, %v1195
        %1205 = vrot.lane.b32.xlu0 %v1177, 15
        %v1206 = vpop.permute.xlu0 %1205
        %1207 = vrot.lane.b32.xlu0 %v1178, 15
        %v1208 = vpop.permute.xlu0 %1207
        %v1209 = vsel %vm676, %v1206, %v1208
        %1213 = vst.msk [vmem:[#allocation2 + $0x48] sm:$0xf] %vm681, %v1206
        %1214 = vst [vmem:[#allocation2 + $0x50] sm:$0xf] %v1209
        %1215 = vst.msk [vmem:[#allocation2 + $0x58] sm:$0xf] %vm684, %v1208
        %1216 = vrot.lane.b32.xlu0 %v1175, 1
        %v1217 = vpop.permute.xlu0 %1216
        %1218 = vrot.lane.b32.xlu0 %v1176, 1
        %v1219 = vpop.permute.xlu0 %1218
        %v1220 = vsel %vm690, %v1217, %v1219
        %1224 = vst.msk [vmem:[#allocation2 + $0x68] sm:$0xf] %vm695, %v1217
        %1225 = vst [vmem:[#allocation2 + $0x70] sm:$0xf] %v1220
        %1226 = vst.msk [vmem:[#allocation2 + $0x78] sm:$0xf] %vm698, %v1219
        %1227 = vst [vmem:[#allocation2 + $0x88] sm:$0xf] %v1089
        %1228 = vst [vmem:[#allocation2 + $0x90] sm:$0xf] %v1090
        %1229 = vrot.lane.b32.xlu0 %v1177, 127
        %v1230 = vpop.permute.xlu0 %1229
        %1231 = vrot.lane.b32.xlu0 %v1178, 127
        %v1232 = vpop.permute.xlu0 %1231
        %v1233 = vsel %vm708, %v1230, %v1232
        %1237 = vst.msk [vmem:[#allocation2 + $0xa0] sm:$0xf] %vm713, %v1230
        %1238 = vst [vmem:[#allocation2 + $0xa8] sm:$0xf] %v1233
        %1239 = vst.msk [vmem:[#allocation2 + $0xb0] sm:$0xf] %vm716, %v1232
        %1240 = vrot.lane.b32.xlu0 %v1175, 113
        %v1241 = vpop.permute.xlu0 %1240
        %1242 = vrot.lane.b32.xlu0 %v1176, 113
        %v1243 = vpop.permute.xlu0 %1242
        %v1244 = vsel %vm722, %v1241, %v1243
        %1248 = vst.msk [vmem:[#allocation2 + $0xc0] sm:$0xf] %vm727, %v1241
        %1249 = vst [vmem:[#allocation2 + $0xc8] sm:$0xf] %v1244
        %1250 = vst.msk [vmem:[#allocation2 + $0xd0] sm:$0xf] %vm730, %v1243
        %1251 = vrot.lane.b32.xlu0 %v1089, 112
        %v1252 = vpop.permute.xlu0 %1251
        %1253 = vrot.lane.b32.xlu0 %v1090, 112
        %v1254 = vpop.permute.xlu0 %1253
        %v1255 = vsel %vm736, %v1252, %v1254
        %1259 = vst.msk [vmem:[#allocation2 + $0xe0] sm:$0xf] %vm741, %v1252
        %1260 = vst [vmem:[#allocation2 + $0xe8] sm:$0xf] %v1255
        %1261 = vst.msk [vmem:[#allocation2 + $0xf0] sm:$0xf] %vm744, %v1254
        %1262 = vrot.lane.b32.xlu0 %v1177, 111
        %v1263 = vpop.permute.xlu0 %1262
        %1264 = vrot.lane.b32.xlu0 %v1178, 111
        %v1265 = vpop.permute.xlu0 %1264
        %v1266 = vsel %vm750, %v1263, %v1265
        %1270 = vst.msk [vmem:[#allocation2 + $0x100] sm:$0xf] %vm755, %v1263
        %1271 = vst [vmem:[#allocation2 + $0x108] sm:$0xf] %v1266
        %1272 = vst.msk [vmem:[#allocation2 + $0x110] sm:$0xf] %vm758, %v1265
        %v1273 = vld [vmem:[#allocation2 + $0x8] sm:$0xff]
        %v1274 = vld [vmem:[#allocation2 + $0x10] sm:$0xff]
        %v1275 = vld [vmem:[#allocation2 + $0x28] sm:$0xff]
        %v1276 = vld [vmem:[#allocation2 + $0x30] sm:$0xff]
        %v1277 = vld [vmem:[#allocation2 + $0x48] sm:$0xff]
        %v1278 = vld [vmem:[#allocation2 + $0x50] sm:$0xff]
        %v1279 = vld [vmem:[#allocation2 + $0x68] sm:$0xff]
        %v1280 = vld [vmem:[#allocation2 + $0x70] sm:$0xff]
        %v1281 = vld [vmem:[#allocation2 + $0x88] sm:$0xff]
        %v1282 = vld [vmem:[#allocation2 + $0x90] sm:$0xff]
        %v1283 = vld [vmem:[#allocation2 + $0xa8] sm:$0xff]
        %v1284 = vld [vmem:[#allocation2 + $0xb0] sm:$0xff]
        %v1285 = vld [vmem:[#allocation2 + $0xc8] sm:$0xff]
        %v1286 = vld [vmem:[#allocation2 + $0xd0] sm:$0xff]
        %v1287 = vld [vmem:[#allocation2 + $0xe8] sm:$0xff]
        %v1288 = vld [vmem:[#allocation2 + $0xf0] sm:$0xff]
        %v1289 = vld [vmem:[#allocation2 + $0x108] sm:$0xff]
        %v1290 = vld [vmem:[#allocation2 + $0x110] sm:$0xff]
        %s1291 = scalar_lea.vmem %s4, 8
        %v1292 = vld [vmem:[%s1291] sm:$0xf]
        %s1293 = scalar_lea.vmem %s5, 8
        %v1294 = vld [vmem:[%s1293] sm:$0xf]
        %1296 = vset.pattern.permute.xlu0 0
        %1297 = vperm.xlu0 %1296, %v1294
        %v1298 = vpop.permute.xlu0 %1297
        %v1301 = vsel %vm785, %v1292, 0
        %1303 = vmatprep.subr.mxu0 %v1274
        %1304 = vmatpush1.msra.mxu0 %v1273
        %1305 = vmatprep.subr.mxu0 %v1276
        %1306 = vmatpush1.msra.mxu0 %v1275
        %1307 = vmatprep.subr.mxu0 %v1278
        %1308 = vmatpush1.msra.mxu0 %v1277
        %1309 = vmatprep.subr.mxu0 %v1280
        %1310 = vmatpush1.msra.mxu0 %v1279
        %1311 = vmatprep.subr.mxu0 %v1282
        %1312 = vmatpush1.msra.mxu0 %v1281
        %1313 = vmatprep.subr.mxu0 %v1284
        %1314 = vmatpush1.msra.mxu0 %v1283
        %1315 = vmatprep.subr.mxu0 %v1286
        %1316 = vmatpush1.msra.mxu0 %v1285
        %1317 = vmatprep.subr.mxu0 %v1288
        %1318 = vmatpush1.msra.mxu0 %v1287
        %1319 = vmatprep.subr.mxu0 %v1290
        %1320 = vmatpush1.msra.mxu0 %v1289
        %1321 = vmatprep.subr.mxu0 0.0
        %1322 = vmatpush1.msra.mxu0 0.0
        %1323 = vmatprep.subr.mxu0 0.0
        %1324 = vmatpush1.msra.mxu0 0.0
        %1325 = vmatprep.subr.mxu0 0.0
        %1326 = vmatpush1.msra.mxu0 0.0
        %1327 = vmatprep.subr.mxu0 0.0
        %1328 = vmatpush1.msra.mxu0 0.0
        %1329 = vmatprep.subr.mxu0 0.0
        %1330 = vmatpush1.msra.mxu0 0.0
        %1331 = vmatprep.subr.mxu0 0.0
        %1332 = vmatpush1.msra.mxu0 0.0
        %1333 = vmatprep.subr.mxu0 0.0
        %1334 = vmatpush1.msra.mxu0 0.0
        %1335 = vmatprep.subr.mxu0 0.0
        %1336 = vmatpush1.msra.mxu0 0.0
        %1337 = vmatprep.subr.mxu0 0.0
        %1338 = vmatpush1.msra.mxu0 0.0
        %1339 = vmatprep.subr.mxu0 0.0
        %1340 = vmatpush1.msra.mxu0 0.0
        %1341 = vmatprep.subr.mxu0 0.0
        %1342 = vmatpush1.msra.mxu0 0.0
        %1343 = vmatprep.subr.mxu0 0.0
        %1344 = vmatpush1.msra.mxu0 0.0
        %1345 = vmatprep.subr.mxu0 0.0
        %1346 = vmatpush1.msra.mxu0 0.0
        %1347 = vmatprep.subr.mxu0 0.0
        %1348 = vmatpush1.msra.mxu0 0.0
        %1349 = vmatprep.subr.mxu0 0.0
        %1350 = vmatpush1.msra.mxu0 0.0
        %1351 = vmatprep.subr.mxu0 0.0
        %1352 = vmatpush1.msra.mxu0 0.0
        %1353 = vmatprep.subr.mxu0 0.0
        %1354 = vmatpush1.msra.mxu0 0.0
        %1355 = vmatprep.subr.mxu0 0.0
        %1356 = vmatpush1.msra.mxu0 0.0
        %1357 = vmatprep.subr.mxu0 0.0
        %1358 = vmatpush1.msra.mxu0 0.0
        %1359 = vmatprep.subr.mxu0 0.0
        %1360 = vmatpush1.msra.mxu0 0.0
        %1361 = vmatprep.subr.mxu0 0.0
        %1362 = vmatpush1.msra.mxu0 0.0
        %1363 = vmatprep.subr.mxu0 0.0
        %1364 = vmatpush1.msra.mxu0 0.0
        %1365 = vmatprep.subr.mxu0 0.0
        %1366 = vmatpush1.msra.mxu0 0.0
        %1367 = vmatprep.mubr.f32.mxu0 0.0
        %1368 = vmatmul.mubr.f32.gmra.mrb[0].mxu0 %v1301
        %v1369 = vpop.f32.mrb[0].mxu0
        %v1370 = vadd.f32 %v1298, %v1369
        %v1371 = vpop.f32.mrb[0].mxu0
        %v1372 = vadd.f32 %v1298, %v1371
        %1373 = vdwg.mxu0
        %v1374 = vxor.u32 %v1370, 2147483648
        %v1375 = vxor.u32 %v1372, 2147483648
        %v1376 = vmul.f32 %v1374, 1.442695
        %v1377 = vpow.pop %v1376
        %v1378 = vmul.f32 %v1375, 1.442695
        %v1379 = vpow.pop %v1378
        %v1380 = vadd.f32 %v1377, 1.0
        %v1381 = vadd.f32 %v1379, 1.0
        %v1382 = vrcp.pop %v1380
        %v1383 = vmul.f32 1.0, %v1382
        %v1384 = vrcp.pop %v1381
        %v1385 = vmul.f32 1.0, %v1384
        %v1386 = vmul.f32 %v1370, %v1383
        %v1387 = vmul.f32 %v1372, %v1385
        %v1388 = vmul.f32 %v1386, %v614
        %v1389 = vmul.f32 %v1387, %v618
        %v1390 = vmul.f32 %v1386, %v627
        %v1391 = vmul.f32 %v1387, %v631
        %1394 = vrot.lane.b32.xlu0 %v1388, 17
        %v1395 = vpop.permute.xlu0 %1394
        %1396 = vrot.lane.b32.xlu0 %v1389, 17
        %v1397 = vpop.permute.xlu0 %1396
        %v1398 = vsel %vm644, %v1395, %v1397
        %1402 = vst.msk [vmem:[#allocation2 + $0x8] sm:$0xf] %vm649, %v1395
        %1403 = vst [vmem:[#allocation2 + $0x10] sm:$0xf] %v1398
        %1404 = vst.msk [vmem:[#allocation2 + $0x18] sm:$0xf] %vm652, %v1397
        %1407 = vrot.lane.b32.xlu0 %v1386, 16
        %v1408 = vpop.permute.xlu0 %1407
        %1409 = vrot.lane.b32.xlu0 %v1387, 16
        %v1410 = vpop.permute.xlu0 %1409
        %v1411 = vsel %vm658, %v1408, %v1410
        %1415 = vst.msk [vmem:[#allocation2 + $0x28] sm:$0xf] %vm663, %v1408
        %1416 = vst [vmem:[#allocation2 + $0x30] sm:$0xf] %v1411
        %1417 = vst.msk [vmem:[#allocation2 + $0x38] sm:$0xf] %vm666, %v1410
        %1420 = vrot.lane.b32.xlu0 %v1390, 15
        %v1421 = vpop.permute.xlu0 %1420
        %1422 = vrot.lane.b32.xlu0 %v1391, 15
        %v1423 = vpop.permute.xlu0 %1422
        %v1424 = vsel %vm676, %v1421, %v1423
        %1428 = vst.msk [vmem:[#allocation2 + $0x48] sm:$0xf] %vm681, %v1421
        %1429 = vst [vmem:[#allocation2 + $0x50] sm:$0xf] %v1424
        %1430 = vst.msk [vmem:[#allocation2 + $0x58] sm:$0xf] %vm684, %v1423
        %1431 = vrot.lane.b32.xlu0 %v1388, 1
        %v1432 = vpop.permute.xlu0 %1431
        %1433 = vrot.lane.b32.xlu0 %v1389, 1
        %v1434 = vpop.permute.xlu0 %1433
        %v1435 = vsel %vm690, %v1432, %v1434
        %1439 = vst.msk [vmem:[#allocation2 + $0x68] sm:$0xf] %vm695, %v1432
        %1440 = vst [vmem:[#allocation2 + $0x70] sm:$0xf] %v1435
        %1441 = vst.msk [vmem:[#allocation2 + $0x78] sm:$0xf] %vm698, %v1434
        %1442 = vst [vmem:[#allocation2 + $0x88] sm:$0xf] %v1386
        %1443 = vst [vmem:[#allocation2 + $0x90] sm:$0xf] %v1387
        %1444 = vrot.lane.b32.xlu0 %v1390, 127
        %v1445 = vpop.permute.xlu0 %1444
        %1446 = vrot.lane.b32.xlu0 %v1391, 127
        %v1447 = vpop.permute.xlu0 %1446
        %v1448 = vsel %vm708, %v1445, %v1447
        %1452 = vst.msk [vmem:[#allocation2 + $0xa0] sm:$0xf] %vm713, %v1445
        %1453 = vst [vmem:[#allocation2 + $0xa8] sm:$0xf] %v1448
        %1454 = vst.msk [vmem:[#allocation2 + $0xb0] sm:$0xf] %vm716, %v1447
        %1455 = vrot.lane.b32.xlu0 %v1388, 113
        %v1456 = vpop.permute.xlu0 %1455
        %1457 = vrot.lane.b32.xlu0 %v1389, 113
        %v1458 = vpop.permute.xlu0 %1457
        %v1459 = vsel %vm722, %v1456, %v1458
        %1463 = vst.msk [vmem:[#allocation2 + $0xc0] sm:$0xf] %vm727, %v1456
        %1464 = vst [vmem:[#allocation2 + $0xc8] sm:$0xf] %v1459
        %1465 = vst.msk [vmem:[#allocation2 + $0xd0] sm:$0xf] %vm730, %v1458
        %1466 = vrot.lane.b32.xlu0 %v1386, 112
        %v1467 = vpop.permute.xlu0 %1466
        %1468 = vrot.lane.b32.xlu0 %v1387, 112
        %v1469 = vpop.permute.xlu0 %1468
        %v1470 = vsel %vm736, %v1467, %v1469
        %1474 = vst.msk [vmem:[#allocation2 + $0xe0] sm:$0xf] %vm741, %v1467
        %1475 = vst [vmem:[#allocation2 + $0xe8] sm:$0xf] %v1470
        %1476 = vst.msk [vmem:[#allocation2 + $0xf0] sm:$0xf] %vm744, %v1469
        %1477 = vrot.lane.b32.xlu0 %v1390, 111
        %v1478 = vpop.permute.xlu0 %1477
        %1479 = vrot.lane.b32.xlu0 %v1391, 111
        %v1480 = vpop.permute.xlu0 %1479
        %v1481 = vsel %vm750, %v1478, %v1480
        %1485 = vst.msk [vmem:[#allocation2 + $0x100] sm:$0xf] %vm755, %v1478
        %1486 = vst [vmem:[#allocation2 + $0x108] sm:$0xf] %v1481
        %1487 = vst.msk [vmem:[#allocation2 + $0x110] sm:$0xf] %vm758, %v1480
        %v1488 = vld [vmem:[#allocation2 + $0x8] sm:$0xff]
        %v1489 = vld [vmem:[#allocation2 + $0x10] sm:$0xff]
        %v1490 = vld [vmem:[#allocation2 + $0x28] sm:$0xff]
        %v1491 = vld [vmem:[#allocation2 + $0x30] sm:$0xff]
        %v1492 = vld [vmem:[#allocation2 + $0x48] sm:$0xff]
        %v1493 = vld [vmem:[#allocation2 + $0x50] sm:$0xff]
        %v1494 = vld [vmem:[#allocation2 + $0x68] sm:$0xff]
        %v1495 = vld [vmem:[#allocation2 + $0x70] sm:$0xff]
        %v1496 = vld [vmem:[#allocation2 + $0x88] sm:$0xff]
        %v1497 = vld [vmem:[#allocation2 + $0x90] sm:$0xff]
        %v1498 = vld [vmem:[#allocation2 + $0xa8] sm:$0xff]
        %v1499 = vld [vmem:[#allocation2 + $0xb0] sm:$0xff]
        %v1500 = vld [vmem:[#allocation2 + $0xc8] sm:$0xff]
        %v1501 = vld [vmem:[#allocation2 + $0xd0] sm:$0xff]
        %v1502 = vld [vmem:[#allocation2 + $0xe8] sm:$0xff]
        %v1503 = vld [vmem:[#allocation2 + $0xf0] sm:$0xff]
        %v1504 = vld [vmem:[#allocation2 + $0x108] sm:$0xff]
        %v1505 = vld [vmem:[#allocation2 + $0x110] sm:$0xff]
        %s1506 = scalar_lea.vmem %s4, 12
        %v1507 = vld [vmem:[%s1506] sm:$0xf]
        %s1508 = scalar_lea.vmem %s5, 12
        %v1509 = vld [vmem:[%s1508] sm:$0xf]
        %1511 = vset.pattern.permute.xlu0 0
        %1512 = vperm.xlu0 %1511, %v1509
        %v1513 = vpop.permute.xlu0 %1512
        %v1516 = vsel %vm785, %v1507, 0
        %1518 = vmatprep.subr.mxu0 %v1489
        %1519 = vmatpush1.msra.mxu0 %v1488
        %1520 = vmatprep.subr.mxu0 %v1491
        %1521 = vmatpush1.msra.mxu0 %v1490
        %1522 = vmatprep.subr.mxu0 %v1493
        %1523 = vmatpush1.msra.mxu0 %v1492
        %1524 = vmatprep.subr.mxu0 %v1495
        %1525 = vmatpush1.msra.mxu0 %v1494
        %1526 = vmatprep.subr.mxu0 %v1497
        %1527 = vmatpush1.msra.mxu0 %v1496
        %1528 = vmatprep.subr.mxu0 %v1499
        %1529 = vmatpush1.msra.mxu0 %v1498
        %1530 = vmatprep.subr.mxu0 %v1501
        %1531 = vmatpush1.msra.mxu0 %v1500
        %1532 = vmatprep.subr.mxu0 %v1503
        %1533 = vmatpush1.msra.mxu0 %v1502
        %1534 = vmatprep.subr.mxu0 %v1505
        %1535 = vmatpush1.msra.mxu0 %v1504
        %1536 = vmatprep.subr.mxu0 0.0
        %1537 = vmatpush1.msra.mxu0 0.0
        %1538 = vmatprep.subr.mxu0 0.0
        %1539 = vmatpush1.msra.mxu0 0.0
        %1540 = vmatprep.subr.mxu0 0.0
        %1541 = vmatpush1.msra.mxu0 0.0
        %1542 = vmatprep.subr.mxu0 0.0
        %1543 = vmatpush1.msra.mxu0 0.0
        %1544 = vmatprep.subr.mxu0 0.0
        %1545 = vmatpush1.msra.mxu0 0.0
        %1546 = vmatprep.subr.mxu0 0.0
        %1547 = vmatpush1.msra.mxu0 0.0
        %1548 = vmatprep.subr.mxu0 0.0
        %1549 = vmatpush1.msra.mxu0 0.0
        %1550 = vmatprep.subr.mxu0 0.0
        %1551 = vmatpush1.msra.mxu0 0.0
        %1552 = vmatprep.subr.mxu0 0.0
        %1553 = vmatpush1.msra.mxu0 0.0
        %1554 = vmatprep.subr.mxu0 0.0
        %1555 = vmatpush1.msra.mxu0 0.0
        %1556 = vmatprep.subr.mxu0 0.0
        %1557 = vmatpush1.msra.mxu0 0.0
        %1558 = vmatprep.subr.mxu0 0.0
        %1559 = vmatpush1.msra.mxu0 0.0
        %1560 = vmatprep.subr.mxu0 0.0
        %1561 = vmatpush1.msra.mxu0 0.0
        %1562 = vmatprep.subr.mxu0 0.0
        %1563 = vmatpush1.msra.mxu0 0.0
        %1564 = vmatprep.subr.mxu0 0.0
        %1565 = vmatpush1.msra.mxu0 0.0
        %1566 = vmatprep.subr.mxu0 0.0
        %1567 = vmatpush1.msra.mxu0 0.0
        %1568 = vmatprep.subr.mxu0 0.0
        %1569 = vmatpush1.msra.mxu0 0.0
        %1570 = vmatprep.subr.mxu0 0.0
        %1571 = vmatpush1.msra.mxu0 0.0
        %1572 = vmatprep.subr.mxu0 0.0
        %1573 = vmatpush1.msra.mxu0 0.0
        %1574 = vmatprep.subr.mxu0 0.0
        %1575 = vmatpush1.msra.mxu0 0.0
        %1576 = vmatprep.subr.mxu0 0.0
        %1577 = vmatpush1.msra.mxu0 0.0
        %1578 = vmatprep.subr.mxu0 0.0
        %1579 = vmatpush1.msra.mxu0 0.0
        %1580 = vmatprep.subr.mxu0 0.0
        %1581 = vmatpush1.msra.mxu0 0.0
        %1582 = vmatprep.mubr.f32.mxu0 0.0
        %1583 = vmatmul.mubr.f32.gmra.mrb[0].mxu0 %v1516
        %v1584 = vpop.f32.mrb[0].mxu0
        %v1585 = vadd.f32 %v1513, %v1584
        %v1586 = vpop.f32.mrb[0].mxu0
        %v1587 = vadd.f32 %v1513, %v1586
        %1588 = vdwg.mxu0
        %v1589 = vxor.u32 %v1585, 2147483648
        %v1590 = vxor.u32 %v1587, 2147483648
        %v1591 = vmul.f32 %v1589, 1.442695
        %v1592 = vpow.pop %v1591
        %v1593 = vmul.f32 %v1590, 1.442695
        %v1594 = vpow.pop %v1593
        %v1595 = vadd.f32 %v1592, 1.0
        %v1596 = vadd.f32 %v1594, 1.0
        %v1597 = vrcp.pop %v1595
        %v1598 = vmul.f32 1.0, %v1597
        %v1599 = vrcp.pop %v1596
        %v1600 = vmul.f32 1.0, %v1599
        %v1601 = vmul.f32 %v1585, %v1598
        %v1602 = vmul.f32 %v1587, %v1600
        %v1603 = vadd.f32 %v1601, %v1089
        %v1604 = vadd.f32 %v1602, %v1090
        %s1605 = scalar_lea.vmem %s6, 24
        %v1606 = vld [vmem:[%s1605] sm:$0xff]
        %v1608 = vsel %vm353, %v1606, 0
        %v1611 = vsel %vm357, %v1603, 0
        %v1614 = vsel %vm357, %v1604, 0
        %1616 = vmatprep.subr.mxu0 %v1614
        %1617 = vmatpush1.msra.mxu0 %v1611
        %1618 = vmatprep.subr.mxu0 0.0
        %1619 = vmatpush1.msra.mxu0 0.0
        %1620 = vmatprep.subr.mxu0 0.0
        %1621 = vmatpush1.msra.mxu0 0.0
        %1622 = vmatprep.subr.mxu0 0.0
        %1623 = vmatpush1.msra.mxu0 0.0
        %1624 = vmatprep.subr.mxu0 0.0
        %1625 = vmatpush1.msra.mxu0 0.0
        %1626 = vmatprep.subr.mxu0 0.0
        %1627 = vmatpush1.msra.mxu0 0.0
        %1628 = vmatprep.subr.mxu0 0.0
        %1629 = vmatpush1.msra.mxu0 0.0
        %1630 = vmatprep.subr.mxu0 0.0
        %1631 = vmatpush1.msra.mxu0 0.0
        %1632 = vmatprep.subr.mxu0 0.0
        %1633 = vmatpush1.msra.mxu0 0.0
        %1634 = vmatprep.subr.mxu0 0.0
        %1635 = vmatpush1.msra.mxu0 0.0
        %1636 = vmatprep.subr.mxu0 0.0
        %1637 = vmatpush1.msra.mxu0 0.0
        %1638 = vmatprep.subr.mxu0 0.0
        %1639 = vmatpush1.msra.mxu0 0.0
        %1640 = vmatprep.subr.mxu0 0.0
        %1641 = vmatpush1.msra.mxu0 0.0
        %1642 = vmatprep.subr.mxu0 0.0
        %1643 = vmatpush1.msra.mxu0 0.0
        %1644 = vmatprep.subr.mxu0 0.0
        %1645 = vmatpush1.msra.mxu0 0.0
        %1646 = vmatprep.subr.mxu0 0.0
        %1647 = vmatpush1.msra.mxu0 0.0
        %1648 = vmatprep.subr.mxu0 0.0
        %1649 = vmatpush1.msra.mxu0 0.0
        %1650 = vmatprep.subr.mxu0 0.0
        %1651 = vmatpush1.msra.mxu0 0.0
        %1652 = vmatprep.subr.mxu0 0.0
        %1653 = vmatpush1.msra.mxu0 0.0
        %1654 = vmatprep.subr.mxu0 0.0
        %1655 = vmatpush1.msra.mxu0 0.0
        %1656 = vmatprep.subr.mxu0 0.0
        %1657 = vmatpush1.msra.mxu0 0.0
        %1658 = vmatprep.subr.mxu0 0.0
        %1659 = vmatpush1.msra.mxu0 0.0
        %1660 = vmatprep.subr.mxu0 0.0
        %1661 = vmatpush1.msra.mxu0 0.0
        %1662 = vmatprep.subr.mxu0 0.0
        %1663 = vmatpush1.msra.mxu0 0.0
        %1664 = vmatprep.subr.mxu0 0.0
        %1665 = vmatpush1.msra.mxu0 0.0
        %1666 = vmatprep.subr.mxu0 0.0
        %1667 = vmatpush1.msra.mxu0 0.0
        %1668 = vmatprep.subr.mxu0 0.0
        %1669 = vmatpush1.msra.mxu0 0.0
        %1670 = vmatprep.subr.mxu0 0.0
        %1671 = vmatpush1.msra.mxu0 0.0
        %1672 = vmatprep.subr.mxu0 0.0
        %1673 = vmatpush1.msra.mxu0 0.0
        %1674 = vmatprep.subr.mxu0 0.0
        %1675 = vmatpush1.msra.mxu0 0.0
        %1676 = vmatprep.subr.mxu0 0.0
        %1677 = vmatpush1.msra.mxu0 0.0
        %1678 = vmatprep.subr.mxu0 0.0
        %1679 = vmatpush1.msra.mxu0 0.0
        %1680 = vmatprep.mubr.f32.mxu0 0.0
        %1681 = vmatmul.mubr.f32.gmra.mrb[0].mxu0 %v1608
        %v1682 = vpop.f32.mrb[0].mxu0
        %v1683 = vadd.f32 0.0, %v1682
        %v1684 = vpop.f32.mrb[0].mxu0
        %v1685 = vadd.f32 0.0, %v1684
        %1686 = vdwg.mxu0
        %v1687 = vadd.f32 %v1173, %v1683
        %v1688 = vadd.f32 %v1174, %v1685
        %v1689 = vld [vmem:[%s7] sm:$0xff]
        %1691 = vset.pattern.permute.xlu0 0
        %1692 = vperm.xlu0 %1691, %v1689
        %v1693 = vpop.permute.xlu0 %1692
        %v1695 = vadd.f32 %v1687, %v1693
        %v1696 = vadd.f32 %v1688, %v1693
        %v1697 = vxor.u32 %v1695, 2147483648
        %v1698 = vxor.u32 %v1696, 2147483648
        %v1699 = vmul.f32 %v1697, 1.442695
        %v1700 = vpow.pop %v1699
        %v1701 = vmul.f32 %v1698, 1.442695
        %v1702 = vpow.pop %v1701
        %v1703 = vadd.f32 %v1700, 1.0
        %v1704 = vadd.f32 %v1702, 1.0
        %v1705 = vrcp.pop %v1703
        %v1706 = vmul.f32 1.0, %v1705
        %v1707 = vrcp.pop %v1704
        %v1708 = vmul.f32 1.0, %v1707
        %v1709 = vmul.f32 %v1695, %v1706
        %v1710 = vmul.f32 %v1696, %v1708
        %1711 = vst [vmem:[%s298] sm:$0xff] %v1709
        %1712 = vst [vmem:[%s298 + $0x8] sm:$0xff] %v1710
        %s1713 = sand.u32 %s203, 1
        %s1714 = scalar_lea.sflag [#allocation4], %s1713
        %s1715 = sand.u32 %s203, 1
        %s1716 = smul.addr %s1715, 16
        %s1717 = scalar_lea.vmem [#allocation3], %s1716
        // Predicated region
        $region53: #{tpu_custom_call.1} parent=51 // pred_check
          %p1718 = pneg %p213
        $region54: #{tpu_custom_call.1} parent=51 // pred_check_branch
          %1720 = sbr.rel (%p1718) target = $region56
        $region55: #{tpu_custom_call.1} parent=51 // pred_region
          %s1722 = ssub.s32 256, 256
          %1723 = vsyncadd %s1714, %s1722
          %s1724 = smul.addr %s22, 2
          %s1725 = smul.addr %s1724, 128
          %s1726 = scalar_lea.hbm %s8, %s1725
          %s1728 = sshll.u32 %s1717, 4
          %s1729 = int_to_ptr.vmem [resolvable:$true] %s1728
          %1731 = dma.vmem_to_hbm [thread:$0]  %s1729, 256, %s1726, %s1714
        $region56: #{tpu_custom_call.1} parent=51 // pred_fallthru
          _
      $region52: #{tpu_custom_call.1} parent=5 // pred_fallthru
        _
      %p1732 = scmp.le.s32.totalorder 2, %s17
      // Predicated region
      $region57: #{tpu_custom_call.1} parent=5 // pred_check
        %p1733 = pneg %p1732
      $region58: #{tpu_custom_call.1} parent=5 // pred_check_branch
        %1735 = sbr.rel (%p1733) target = $region60
      $region59: #{tpu_custom_call.1} parent=5 // pred_region
        %s1736 = ssub.s32 %s17, 2
        // Predicated region
        $region61: #{tpu_custom_call.1} parent=59 // pred_check
          %p1737 = pneg %p219
        $region62: #{tpu_custom_call.1} parent=59 // pred_check_branch
          %1739 = sbr.rel (%p1737) target = $region64
        $region63: #{tpu_custom_call.1} parent=59 // pred_region
          %s1740 = sand.u32 %s204, 1
          %s1741 = scalar_lea.sflag [#allocation4], %s1740
          %s1742 = sand.u32 %s204, 1
          %s1743 = smul.addr %s1742, 16
          %s1744 = scalar_lea.vmem [#allocation3], %s1743
          %1745 = dma.done %s1741, 256
        $region64: #{tpu_custom_call.1} parent=59 // pred_fallthru
          _
      $region60: #{tpu_custom_call.1} parent=5 // pred_fallthru
        _
    $region6: #{tpu_custom_call.1} parent=1 // loop_footer
      %s21 = sadd.s32 1, %s17
    $region7: #{tpu_custom_call.1} parent=1 // loop_footer_branch
      %16 = sbr.rel target = $region3
    $region8: #{tpu_custom_call.1} parent=1 // loop_exit
      _
    %1746 = vsyncpa [#allocation4], 1
    %s1747 = scalar_lea.sflag [#allocation4], 1
    %1748 = vsyncpa %s1747, 1

</llo_original>
